<compile_context>
chip_gen: v7x
topology: tpu7x:2x2x1
jax: 0.10.0
libtpu: 0.0.40
codegen_flags: <defaults>
</compile_context>

<pallas_src>
import jax
import jax.numpy as jnp
from jax.experimental import pallas as pl
from jax.experimental.pallas import tpu as pltpu

C1 = 0.01 ** 2
C2 = 0.03 ** 2


def _ssim_kernel(x_ref, y_ref, o_ref):
    # x_ref / y_ref / o_ref: (PB, H, W) unpadded planes.
    H = x_ref.shape[1]
    W = x_ref.shape[2]

    x = x_ref[...]
    y = y_ref[...]

    # Edge masks (built once, reused by all five pooled planes).
    row = jax.lax.broadcasted_iota(jnp.int32, x.shape, 1)
    col = jax.lax.broadcasted_iota(jnp.int32, x.shape, 2)
    first_row = row == 0
    last_row = row == H - 1
    first_col = col == 0
    last_col = col == W - 1

    def vsum(a):
        # Vertical (sublane) 3-tap sum with ReflectionPad(1) semantics.
        up = pltpu.roll(a, shift=1, axis=1)       # up[i] = a[i-1] (wraps at i=0)
        dn = pltpu.roll(a, shift=H - 1, axis=1)   # dn[i] = a[i+1] (wraps at i=H-1)
        up_f = jnp.where(first_row, dn, up)       # row 0   : reflect -> a[1]
        dn_f = jnp.where(last_row, up, dn)        # row H-1 : reflect -> a[H-2]
        return up_f + a + dn_f

    def hsum(a):
        # Horizontal (lane) 3-tap sum with ReflectionPad(1) semantics.
        lf = pltpu.roll(a, shift=1, axis=2)       # lf[j] = a[j-1] (wraps at j=0)
        rt = pltpu.roll(a, shift=W - 1, axis=2)   # rt[j] = a[j+1] (wraps at j=W-1)
        lf_f = jnp.where(first_col, rt, lf)       # col 0   : reflect -> a[1]
        rt_f = jnp.where(last_col, lf, rt)        # col W-1 : reflect -> a[W-2]
        return lf_f + a + rt_f

    inv9 = jnp.float32(1.0 / 9.0)

    def pool3x3(a):
        # Separable reflect-padded 3x3 average pool.
        return hsum(vsum(a)) * inv9

    mu_x = pool3x3(x)
    mu_y = pool3x3(y)
    sigma_x = pool3x3(x * x) - mu_x * mu_x
    sigma_y = pool3x3(y * y) - mu_y * mu_y
    sigma_xy = pool3x3(x * y) - mu_x * mu_y

    ssim_n = (2.0 * mu_x * mu_y + C1) * (2.0 * sigma_xy + C2)
    ssim_d = (mu_x * mu_x + mu_y * mu_y + C1) * (sigma_x + sigma_y + C2)

    # ssim_d >= C1*C2 > 0, so the reciprocal is always well defined.
    out = (1.0 - ssim_n * pl.reciprocal(ssim_d, approx=False)) * 0.5
    o_ref[...] = jnp.clip(out, 0.0, 1.0).astype(o_ref.dtype)


def _choose_plane_block(num_planes, H, W, budget_bytes=12 * 1024 * 1024):
    """Largest plane batch PB such that:
      (a) PB divides num_planes,
      (b) the in-kernel working set (double-buffered IO + pooled temporaries,
          ~16 f32 planes per batched plane, conservative) fits `budget_bytes`,
      (c) at least 2 grid steps remain when possible (keeps both v7x TCs busy
          and lets the BlockSpec pipeline overlap DMA with compute).
    """
    per_plane_bytes = 16 * H * W * 4
    best = 1
    for pb in range(1, num_planes + 1):
        if num_planes % pb:
            continue
        if pb * per_plane_bytes > budget_bytes:
            break
        if num_planes // pb >= 2 or num_planes == 1:
            best = pb
    return best


def ssim(x, y):
    """SSIM loss map. x, y: (N, C, H, W) -> (N, C, H, W), same dtype as x."""
    assert x.shape == y.shape
    N, C, H, W = x.shape
    P = N * C
    x32 = x.astype(jnp.float32).reshape(P, H, W)
    y32 = y.astype(jnp.float32).reshape(P, H, W)

    PB = _choose_plane_block(P, H, W)
    grid = (P // PB,)

    out = pl.pallas_call(
        _ssim_kernel,
        out_shape=jax.ShapeDtypeStruct((P, H, W), x.dtype),
        grid_spec=pltpu.PrefetchScalarGridSpec(
            num_scalar_prefetch=0,
            grid=grid,
            in_specs=[
                pl.BlockSpec((PB, H, W), lambda i: (i, 0, 0)),
                pl.BlockSpec((PB, H, W), lambda i: (i, 0, 0)),
            ],
            out_specs=pl.BlockSpec((PB, H, W), lambda i: (i, 0, 0)),
        ),
        compiler_params=pltpu.CompilerParams(
            dimension_semantics=("parallel",),
            # 32 MiB scoped VMEM is safe on every chip (v7x physical = 64 MiB).
            vmem_limit_bytes=32 * 1024 * 1024,
        ),
    )(x32, y32)

    return out.reshape(N, C, H, W)


if __name__ == "__main__":
    key = jax.random.PRNGKey(0)
    kx, ky = jax.random.split(key)
    N, C, H, W = 2, 4, 16, 16
    x = jax.random.uniform(kx, (N, C, H, W), dtype=jnp.float32)
    y = jax.random.uniform(ky, (N, C, H, W), dtype=jnp.float32)

    out = ssim(x, y)
    jax.block_until_ready(out)

    # Pure-JAX reference (matches the PyTorch module).
    def ref_ssim(x, y):
        pad = ((0, 0), (0, 0), (1, 1), (1, 1))
        xp = jnp.pad(x, pad, mode="reflect")
        yp = jnp.pad(y, pad, mode="reflect")

        def pool(a):
            s = jnp.zeros(x.shape, jnp.float32)
            for di in range(3):
                for dj in range(3):
                    s = s + a[:, :, di:di + H, dj:dj + W]
            return s / 9.0

        mu_x, mu_y = pool(xp), pool(yp)
        sx = pool(xp * xp) - mu_x ** 2
        sy = pool(yp * yp) - mu_y ** 2
        sxy = pool(xp * yp) - mu_x * mu_y
        n = (2 * mu_x * mu_y + C1) * (2 * sxy + C2)
        d = (mu_x ** 2 + mu_y ** 2 + C1) * (sx + sy + C2)
        return jnp.clip((1 - n / d) / 2, 0.0, 1.0)

    ref = ref_ssim(x, y)
    assert jnp.allclose(out, ref, atol=1e-5, rtol=1e-5), "mismatch vs reference"
    print("KERNEL_OK")
</pallas_src>

<mosaic_0001>
module attributes {stable_mosaic.version = 11 : i64} {
  func.func @_ssim_kernel(%arg0: i32, %arg1: memref<4x16x16xf32, #tpu.memory_space<vmem>>, %arg2: memref<4x16x16xf32, #tpu.memory_space<vmem>>, %arg3: memref<4x16x16xf32, #tpu.memory_space<vmem>>) attributes {dimension_semantics = [#tpu.dimension_semantics<parallel>], iteration_bounds = array<i64: 2>, scalar_prefetch = 0 : i64, scratch_operands = 0 : i64, tpu.core_type = #tpu.core_type<tc>, window_params = [{transform_indices = @transform_0, window_bounds = array<i64: 4, 16, 16>}, {transform_indices = @transform_1, window_bounds = array<i64: 4, 16, 16>}, {transform_indices = @transform_2, window_bounds = array<i64: 4, 16, 16>}]} {
    %c0 = arith.constant 0 : index
    %c0_0 = arith.constant 0 : index
    %c0_1 = arith.constant 0 : index
    %0 = vector.load %arg1[%c0, %c0_0, %c0_1] : memref<4x16x16xf32, #tpu.memory_space<vmem>>, vector<4x16x16xf32>
    %c0_2 = arith.constant 0 : index
    %c0_3 = arith.constant 0 : index
    %c0_4 = arith.constant 0 : index
    %1 = vector.load %arg2[%c0_2, %c0_3, %c0_4] : memref<4x16x16xf32, #tpu.memory_space<vmem>>, vector<4x16x16xf32>
    %2 = tpu.iota {dimensions = array<i32: 1>} : vector<4x16x16xi32>
    %3 = tpu.iota {dimensions = array<i32: 2>} : vector<4x16x16xi32>
    %c0_i32 = arith.constant 0 : i32
    %4 = vector.broadcast %c0_i32 : i32 to vector<4x16x16xi32>
    %5 = arith.cmpi eq, %2, %4 : vector<4x16x16xi32>
    %c15_i32 = arith.constant 15 : i32
    %6 = vector.broadcast %c15_i32 : i32 to vector<4x16x16xi32>
    %7 = arith.cmpi eq, %2, %6 : vector<4x16x16xi32>
    %c0_i32_5 = arith.constant 0 : i32
    %8 = vector.broadcast %c0_i32_5 : i32 to vector<4x16x16xi32>
    %9 = arith.cmpi eq, %3, %8 : vector<4x16x16xi32>
    %c15_i32_6 = arith.constant 15 : i32
    %10 = vector.broadcast %c15_i32_6 : i32 to vector<4x16x16xi32>
    %11 = arith.cmpi eq, %3, %10 : vector<4x16x16xi32>
    %c1_i32 = arith.constant 1 : i32
    %12 = tpu.dynamic_rotate %0 by %c1_i32 dim 1 : vector<4x16x16xf32>, i32 -> vector<4x16x16xf32>
    %c15_i32_7 = arith.constant 15 : i32
    %13 = tpu.dynamic_rotate %0 by %c15_i32_7 dim 1 : vector<4x16x16xf32>, i32 -> vector<4x16x16xf32>
    %14 = arith.select %5, %13, %12 : vector<4x16x16xi1>, vector<4x16x16xf32>
    %15 = arith.select %7, %12, %13 : vector<4x16x16xi1>, vector<4x16x16xf32>
    %16 = arith.addf %14, %0 : vector<4x16x16xf32>
    %17 = arith.addf %16, %15 : vector<4x16x16xf32>
    %c1_i32_8 = arith.constant 1 : i32
    %18 = tpu.dynamic_rotate %17 by %c1_i32_8 dim 2 : vector<4x16x16xf32>, i32 -> vector<4x16x16xf32>
    %c15_i32_9 = arith.constant 15 : i32
    %19 = tpu.dynamic_rotate %17 by %c15_i32_9 dim 2 : vector<4x16x16xf32>, i32 -> vector<4x16x16xf32>
    %20 = arith.select %9, %19, %18 : vector<4x16x16xi1>, vector<4x16x16xf32>
    %21 = arith.select %11, %18, %19 : vector<4x16x16xi1>, vector<4x16x16xf32>
    %22 = arith.addf %20, %17 : vector<4x16x16xf32>
    %23 = arith.addf %22, %21 : vector<4x16x16xf32>
    %cst = arith.constant 0.111111112 : f32
    %24 = vector.broadcast %cst : f32 to vector<4x16x16xf32>
    %25 = arith.mulf %23, %24 : vector<4x16x16xf32>
    %c1_i32_10 = arith.constant 1 : i32
    %26 = tpu.dynamic_rotate %1 by %c1_i32_10 dim 1 : vector<4x16x16xf32>, i32 -> vector<4x16x16xf32>
    %c15_i32_11 = arith.constant 15 : i32
    %27 = tpu.dynamic_rotate %1 by %c15_i32_11 dim 1 : vector<4x16x16xf32>, i32 -> vector<4x16x16xf32>
    %28 = arith.select %5, %27, %26 : vector<4x16x16xi1>, vector<4x16x16xf32>
    %29 = arith.select %7, %26, %27 : vector<4x16x16xi1>, vector<4x16x16xf32>
    %30 = arith.addf %28, %1 : vector<4x16x16xf32>
    %31 = arith.addf %30, %29 : vector<4x16x16xf32>
    %c1_i32_12 = arith.constant 1 : i32
    %32 = tpu.dynamic_rotate %31 by %c1_i32_12 dim 2 : vector<4x16x16xf32>, i32 -> vector<4x16x16xf32>
    %c15_i32_13 = arith.constant 15 : i32
    %33 = tpu.dynamic_rotate %31 by %c15_i32_13 dim 2 : vector<4x16x16xf32>, i32 -> vector<4x16x16xf32>
    %34 = arith.select %9, %33, %32 : vector<4x16x16xi1>, vector<4x16x16xf32>
    %35 = arith.select %11, %32, %33 : vector<4x16x16xi1>, vector<4x16x16xf32>
    %36 = arith.addf %34, %31 : vector<4x16x16xf32>
    %37 = arith.addf %36, %35 : vector<4x16x16xf32>
    %cst_14 = arith.constant 0.111111112 : f32
    %38 = vector.broadcast %cst_14 : f32 to vector<4x16x16xf32>
    %39 = arith.mulf %37, %38 : vector<4x16x16xf32>
    %40 = arith.mulf %0, %0 : vector<4x16x16xf32>
    %c1_i32_15 = arith.constant 1 : i32
    %41 = tpu.dynamic_rotate %40 by %c1_i32_15 dim 1 : vector<4x16x16xf32>, i32 -> vector<4x16x16xf32>
    %c15_i32_16 = arith.constant 15 : i32
    %42 = tpu.dynamic_rotate %40 by %c15_i32_16 dim 1 : vector<4x16x16xf32>, i32 -> vector<4x16x16xf32>
    %43 = arith.select %5, %42, %41 : vector<4x16x16xi1>, vector<4x16x16xf32>
    %44 = arith.select %7, %41, %42 : vector<4x16x16xi1>, vector<4x16x16xf32>
    %45 = arith.addf %43, %40 : vector<4x16x16xf32>
    %46 = arith.addf %45, %44 : vector<4x16x16xf32>
    %c1_i32_17 = arith.constant 1 : i32
    %47 = tpu.dynamic_rotate %46 by %c1_i32_17 dim 2 : vector<4x16x16xf32>, i32 -> vector<4x16x16xf32>
    %c15_i32_18 = arith.constant 15 : i32
    %48 = tpu.dynamic_rotate %46 by %c15_i32_18 dim 2 : vector<4x16x16xf32>, i32 -> vector<4x16x16xf32>
    %49 = arith.select %9, %48, %47 : vector<4x16x16xi1>, vector<4x16x16xf32>
    %50 = arith.select %11, %47, %48 : vector<4x16x16xi1>, vector<4x16x16xf32>
    %51 = arith.addf %49, %46 : vector<4x16x16xf32>
    %52 = arith.addf %51, %50 : vector<4x16x16xf32>
    %cst_19 = arith.constant 0.111111112 : f32
    %53 = vector.broadcast %cst_19 : f32 to vector<4x16x16xf32>
    %54 = arith.mulf %52, %53 : vector<4x16x16xf32>
    %55 = arith.mulf %25, %25 : vector<4x16x16xf32>
    %56 = arith.subf %54, %55 : vector<4x16x16xf32>
    %57 = arith.mulf %1, %1 : vector<4x16x16xf32>
    %c1_i32_20 = arith.constant 1 : i32
    %58 = tpu.dynamic_rotate %57 by %c1_i32_20 dim 1 : vector<4x16x16xf32>, i32 -> vector<4x16x16xf32>
    %c15_i32_21 = arith.constant 15 : i32
    %59 = tpu.dynamic_rotate %57 by %c15_i32_21 dim 1 : vector<4x16x16xf32>, i32 -> vector<4x16x16xf32>
    %60 = arith.select %5, %59, %58 : vector<4x16x16xi1>, vector<4x16x16xf32>
    %61 = arith.select %7, %58, %59 : vector<4x16x16xi1>, vector<4x16x16xf32>
    %62 = arith.addf %60, %57 : vector<4x16x16xf32>
    %63 = arith.addf %62, %61 : vector<4x16x16xf32>
    %c1_i32_22 = arith.constant 1 : i32
    %64 = tpu.dynamic_rotate %63 by %c1_i32_22 dim 2 : vector<4x16x16xf32>, i32 -> vector<4x16x16xf32>
    %c15_i32_23 = arith.constant 15 : i32
    %65 = tpu.dynamic_rotate %63 by %c15_i32_23 dim 2 : vector<4x16x16xf32>, i32 -> vector<4x16x16xf32>
    %66 = arith.select %9, %65, %64 : vector<4x16x16xi1>, vector<4x16x16xf32>
    %67 = arith.select %11, %64, %65 : vector<4x16x16xi1>, vector<4x16x16xf32>
    %68 = arith.addf %66, %63 : vector<4x16x16xf32>
    %69 = arith.addf %68, %67 : vector<4x16x16xf32>
    %cst_24 = arith.constant 0.111111112 : f32
    %70 = vector.broadcast %cst_24 : f32 to vector<4x16x16xf32>
    %71 = arith.mulf %69, %70 : vector<4x16x16xf32>
    %72 = arith.mulf %39, %39 : vector<4x16x16xf32>
    %73 = arith.subf %71, %72 : vector<4x16x16xf32>
    %74 = arith.mulf %0, %1 : vector<4x16x16xf32>
    %c1_i32_25 = arith.constant 1 : i32
    %75 = tpu.dynamic_rotate %74 by %c1_i32_25 dim 1 : vector<4x16x16xf32>, i32 -> vector<4x16x16xf32>
    %c15_i32_26 = arith.constant 15 : i32
    %76 = tpu.dynamic_rotate %74 by %c15_i32_26 dim 1 : vector<4x16x16xf32>, i32 -> vector<4x16x16xf32>
    %77 = arith.select %5, %76, %75 : vector<4x16x16xi1>, vector<4x16x16xf32>
    %78 = arith.select %7, %75, %76 : vector<4x16x16xi1>, vector<4x16x16xf32>
    %79 = arith.addf %77, %74 : vector<4x16x16xf32>
    %80 = arith.addf %79, %78 : vector<4x16x16xf32>
    %c1_i32_27 = arith.constant 1 : i32
    %81 = tpu.dynamic_rotate %80 by %c1_i32_27 dim 2 : vector<4x16x16xf32>, i32 -> vector<4x16x16xf32>
    %c15_i32_28 = arith.constant 15 : i32
    %82 = tpu.dynamic_rotate %80 by %c15_i32_28 dim 2 : vector<4x16x16xf32>, i32 -> vector<4x16x16xf32>
    %83 = arith.select %9, %82, %81 : vector<4x16x16xi1>, vector<4x16x16xf32>
    %84 = arith.select %11, %81, %82 : vector<4x16x16xi1>, vector<4x16x16xf32>
    %85 = arith.addf %83, %80 : vector<4x16x16xf32>
    %86 = arith.addf %85, %84 : vector<4x16x16xf32>
    %cst_29 = arith.constant 0.111111112 : f32
    %87 = vector.broadcast %cst_29 : f32 to vector<4x16x16xf32>
    %88 = arith.mulf %86, %87 : vector<4x16x16xf32>
    %89 = arith.mulf %25, %39 : vector<4x16x16xf32>
    %90 = arith.subf %88, %89 : vector<4x16x16xf32>
    %cst_30 = arith.constant 2.000000e+00 : f32
    %91 = vector.broadcast %cst_30 : f32 to vector<4x16x16xf32>
    %92 = arith.mulf %91, %25 : vector<4x16x16xf32>
    %93 = arith.mulf %92, %39 : vector<4x16x16xf32>
    %cst_31 = arith.constant 9.99999974E-5 : f32
    %94 = vector.broadcast %cst_31 : f32 to vector<4x16x16xf32>
    %95 = arith.addf %93, %94 : vector<4x16x16xf32>
    %cst_32 = arith.constant 2.000000e+00 : f32
    %96 = vector.broadcast %cst_32 : f32 to vector<4x16x16xf32>
    %97 = arith.mulf %96, %90 : vector<4x16x16xf32>
    %cst_33 = arith.constant 8.99999984E-4 : f32
    %98 = vector.broadcast %cst_33 : f32 to vector<4x16x16xf32>
    %99 = arith.addf %97, %98 : vector<4x16x16xf32>
    %100 = arith.mulf %95, %99 : vector<4x16x16xf32>
    %101 = arith.mulf %25, %25 : vector<4x16x16xf32>
    %102 = arith.mulf %39, %39 : vector<4x16x16xf32>
    %103 = arith.addf %101, %102 : vector<4x16x16xf32>
    %cst_34 = arith.constant 9.99999974E-5 : f32
    %104 = vector.broadcast %cst_34 : f32 to vector<4x16x16xf32>
    %105 = arith.addf %103, %104 : vector<4x16x16xf32>
    %106 = arith.addf %56, %73 : vector<4x16x16xf32>
    %cst_35 = arith.constant 8.99999984E-4 : f32
    %107 = vector.broadcast %cst_35 : f32 to vector<4x16x16xf32>
    %108 = arith.addf %106, %107 : vector<4x16x16xf32>
    %109 = arith.mulf %105, %108 : vector<4x16x16xf32>
    %110 = tpu.reciprocal %109 : vector<4x16x16xf32> -> vector<4x16x16xf32>
    %111 = arith.mulf %100, %110 : vector<4x16x16xf32>
    %cst_36 = arith.constant 1.000000e+00 : f32
    %112 = vector.broadcast %cst_36 : f32 to vector<4x16x16xf32>
    %113 = arith.subf %112, %111 : vector<4x16x16xf32>
    %cst_37 = arith.constant 5.000000e-01 : f32
    %114 = vector.broadcast %cst_37 : f32 to vector<4x16x16xf32>
    %115 = arith.mulf %113, %114 : vector<4x16x16xf32>
    %cst_38 = arith.constant 0.000000e+00 : f32
    %cst_39 = arith.constant 1.000000e+00 : f32
    %116 = vector.broadcast %cst_38 : f32 to vector<4x16x16xf32>
    %117 = arith.maximumf %116, %115 : vector<4x16x16xf32>
    %118 = vector.broadcast %cst_39 : f32 to vector<4x16x16xf32>
    %119 = arith.minimumf %118, %117 : vector<4x16x16xf32>
    %c0_40 = arith.constant 0 : index
    %c0_41 = arith.constant 0 : index
    %c0_42 = arith.constant 0 : index
    %120 = vector.load %arg3[%c0_40, %c0_41, %c0_42] : memref<4x16x16xf32, #tpu.memory_space<vmem>>, vector<4x16x16xf32>
    tpu.vector_store %arg3[%c0_40, %c0_41, %c0_42], %119 {strides = array<i32>} : memref<4x16x16xf32, #tpu.memory_space<vmem>>, vector<4x16x16xf32>,
    return
  }
  func.func @transform_0(%arg0: i32) -> (i32, i32, i32) {
    %c0_i32 = arith.constant 0 : i32
    %c0_i32_0 = arith.constant 0 : i32
    %c0_i32_1 = arith.constant 0 : i32
    return %arg0, %c0_i32, %c0_i32_0 : i32, i32, i32
  }
  func.func @transform_1(%arg0: i32) -> (i32, i32, i32) {
    %c0_i32 = arith.constant 0 : i32
    %c0_i32_0 = arith.constant 0 : i32
    %c0_i32_1 = arith.constant 0 : i32
    return %arg0, %c0_i32, %c0_i32_0 : i32, i32, i32
  }
  func.func @transform_2(%arg0: i32) -> (i32, i32, i32) {
    %c0_i32 = arith.constant 0 : i32
    %c0_i32_0 = arith.constant 0 : i32
    %c0_i32_1 = arith.constant 0 : i32
    return %arg0, %c0_i32, %c0_i32_0 : i32, i32, i32
  }
}

</mosaic_0001>

<llo_original>
// kernel: tpu_custom_call.1
$region0: #{tpu_custom_call.1}
  #allocation0 [shape = 'u32[]', space=smem, size = 0x4, offset = 0x4, fixed_abs, tag = 'smem constant byte address 0x4 - core index']
  #allocation1 [shape = 'u32[144,128]{1,0:T(1,128)}', space=vmem, size = 0x12000, scoped, tag = 'internal scratch']
  %s0 = inlined_call_operand.hbm [shape: f32[8,16,16], index: 0, kind: input, shape index: {}]
  %s1 = inlined_call_operand.hbm [shape: f32[8,16,16], index: 1, kind: input, shape index: {}]
  %s2 = inlined_call_operand.hbm [shape: f32[8,16,16], index: 2, kind: output, shape index: {}]
  %s3 = sld [smem:[#allocation0]]
  $region49: #{tpu_custom_call.1} parent=0
    _
  %s5 = ssub.s32 1, %s3
  %s6 = scalar_select 0, %s5, %s3
  $region1: #{tpu_custom_call.1} parent=0
    #allocation2 [shape = 'u8[65536]{0}', space=vmem, size = 0x10000, scoped, tag = 'input window, operand 0']
    #allocation3 [shape = 's32[2]{0}', space=sflag, size = 0x8, scoped, tag = 'scoped memory for tpu_custom_call.1']
    #allocation4 [shape = 's32[2]{0}', space=sflag, size = 0x8, scoped, tag = 'scoped memory for tpu_custom_call.1']
    #allocation5 [shape = 'u8[65536]{0}', space=vmem, size = 0x10000, scoped, tag = 'input window, operand 1']
    #allocation6 [shape = 's32[2]{0}', space=sflag, size = 0x8, scoped, tag = 'scoped memory for tpu_custom_call.1']
    #allocation7 [shape = 'u8[65536]{0}', space=vmem, size = 0x10000, scoped, tag = 'output window, operand 0']
    %7 = vsyncpa [#allocation3], 0
    %s8 = scalar_lea.sflag [#allocation3], 1
    %9 = vsyncpa %s8, 0
    %10 = vsyncpa [#allocation6], 0
    %s11 = scalar_lea.sflag [#allocation6], 1
    %12 = vsyncpa %s11, 0
    %13 = vsyncpa [#allocation4], 0
    %s14 = scalar_lea.sflag [#allocation4], 1
    %15 = vsyncpa %s14, 0
    loop: start=0, step=1, limit=4
    $region2: #{tpu_custom_call.1} parent=1 // loop_pre_header
      _
    $region3: #{tpu_custom_call.1} parent=1 // loop_header
      %s17 = sphi 0, %s21
      %p18 = scmp.ge.s32.totalorder %s17, 4
      %s27 = sphi 0, %s29
      %s30 = sphi 0, %s27
      %s31 = sphi 0, %s30
      %s47 = sphi 0, %s31
      %s53 = sphi 0, %s55
      %s56 = sphi 0, %s53
      %s57 = sphi 0, %s56
      %s73 = sphi 0, %s57
      %s79 = sphi 0, %s81
      %s82 = sphi 0, %s79
      %s83 = sphi 0, %s82
      %s99 = sphi 0, %s83
    $region4: #{tpu_custom_call.1} parent=1 // loop_header_branch
      %20 = sbr.rel (%p18) target = $region8
    $region5: #{tpu_custom_call.1} parent=1 // loop_body
      %s22 = ssub.s32 %s17, 1
      %s23 = ssub.s32 %s17, 2
      %s24 = sadd.s32 %s17, 1
      %s25 = ssub.s32 %s17, %s24
      %p26 = scmp.eq.s32.totalorder %s25, 0
      %s28 = sadd.s32 %s27, 1
      %s29 = scalar_select %p26, %s27, %s28
      %p32 = pneg %p26
      %p33 = scmp.eq.s32.totalorder %s17, 1
      %p34 = por %p32, %p33
      %p35 = scmp.ne.s32.totalorder %s27, %s30
      %p36 = scmp.eq.s32.totalorder %s17, 0
      %p37 = por %p35, %p36
      %p38 = scmp.ne.s32.totalorder %s27, %s30
      %p39 = scmp.eq.s32.totalorder %s22, 1
      %p40 = por %p38, %p39
      %p41 = scmp.ne.s32.totalorder %s30, %s31
      %p42 = scmp.eq.s32.totalorder %s22, 0
      %p43 = por %p41, %p42
      %p44 = scmp.ne.s32.totalorder %s30, %s31
      %p45 = scmp.eq.s32.totalorder %s23, 1
      %p46 = por %p44, %p45
      %p48 = scmp.ne.s32.totalorder %s31, %s47
      %p49 = scmp.eq.s32.totalorder %s23, 0
      %p50 = por %p48, %p49
      %s51 = ssub.s32 %s17, %s24
      %p52 = scmp.eq.s32.totalorder %s51, 0
      %s54 = sadd.s32 %s53, 1
      %s55 = scalar_select %p52, %s53, %s54
      %p58 = pneg %p52
      %p59 = scmp.eq.s32.totalorder %s17, 1
      %p60 = por %p58, %p59
      %p61 = scmp.ne.s32.totalorder %s53, %s56
      %p62 = scmp.eq.s32.totalorder %s17, 0
      %p63 = por %p61, %p62
      %p64 = scmp.ne.s32.totalorder %s53, %s56
      %p65 = scmp.eq.s32.totalorder %s22, 1
      %p66 = por %p64, %p65
      %p67 = scmp.ne.s32.totalorder %s56, %s57
      %p68 = scmp.eq.s32.totalorder %s22, 0
      %p69 = por %p67, %p68
      %p70 = scmp.ne.s32.totalorder %s56, %s57
      %p71 = scmp.eq.s32.totalorder %s23, 1
      %p72 = por %p70, %p71
      %p74 = scmp.ne.s32.totalorder %s57, %s73
      %p75 = scmp.eq.s32.totalorder %s23, 0
      %p76 = por %p74, %p75
      %s77 = ssub.s32 %s17, %s24
      %p78 = scmp.eq.s32.totalorder %s77, 0
      %s80 = sadd.s32 %s79, 1
      %s81 = scalar_select %p78, %s79, %s80
      %p84 = pneg %p78
      %p85 = scmp.eq.s32.totalorder %s17, 1
      %p86 = por %p84, %p85
      %p87 = scmp.ne.s32.totalorder %s79, %s82
      %p88 = scmp.eq.s32.totalorder %s17, 0
      %p89 = por %p87, %p88
      %p90 = scmp.ne.s32.totalorder %s79, %s82
      %p91 = scmp.eq.s32.totalorder %s22, 1
      %p92 = por %p90, %p91
      %p93 = scmp.ne.s32.totalorder %s82, %s83
      %p94 = scmp.eq.s32.totalorder %s22, 0
      %p95 = por %p93, %p94
      %p96 = scmp.ne.s32.totalorder %s82, %s83
      %p97 = scmp.eq.s32.totalorder %s23, 1
      %p98 = por %p96, %p97
      %p100 = scmp.ne.s32.totalorder %s83, %s99
      %p101 = scmp.eq.s32.totalorder %s23, 0
      %p102 = por %p100, %p101
      %p103 = scmp.le.s32.totalorder 1, %s17
      %p104 = scmp.lt.s32.totalorder %s17, 3
      %p105 = pnand %p103, %p104
      %p106 = pneg %p105
      // Predicated region
      $region9: #{tpu_custom_call.1} parent=5 // pred_check
        _
      $region10: #{tpu_custom_call.1} parent=5 // pred_check_branch
        %108 = sbr.rel (%p105) target = $region12
      $region11: #{tpu_custom_call.1} parent=5 // pred_region
        %s109 = ssub.s32 %s17, 1
      $region12: #{tpu_custom_call.1} parent=5 // pred_fallthru
        _
      %p110 = scmp.lt.s32.totalorder %s17, 2
      // Predicated region
      $region13: #{tpu_custom_call.1} parent=5 // pred_check
        %p111 = pneg %p110
      $region14: #{tpu_custom_call.1} parent=5 // pred_check_branch
        %113 = sbr.rel (%p111) target = $region16
      $region15: #{tpu_custom_call.1} parent=5 // pred_region
        // Predicated region
        $region17: #{tpu_custom_call.1} parent=15 // pred_check
          %p114 = pneg %p37
        $region18: #{tpu_custom_call.1} parent=15 // pred_check_branch
          %116 = sbr.rel (%p114) target = $region20
        $region19: #{tpu_custom_call.1} parent=15 // pred_region
          %s117 = sand.u32 %s27, 1
          %s118 = scalar_lea.sflag [#allocation3], %s117
          %s119 = sand.u32 %s27, 1
          %s120 = smul.addr %s119, 64
          %s121 = scalar_lea.vmem [#allocation2], %s120
          %s122 = smul.u32 4, %s17
          %s124 = ssub.s32 1024, 1024
          %125 = vsyncadd %s118, %s124
          %s126 = smul.addr %s122, 2
          %s127 = smul.addr %s126, 128
          %s128 = scalar_lea.hbm %s0, %s127
          %s129 = sshll.u32 %s121, 4
          %s130 = int_to_ptr.vmem [resolvable:$true] %s129
          %135 = dma.hbm_to_vmem [thread:$0]  %s128, 1024, %s130, %s118, 128, 128, 8
        $region20: #{tpu_custom_call.1} parent=15 // pred_fallthru
          _
        // Predicated region
        $region21: #{tpu_custom_call.1} parent=15 // pred_check
          %p136 = pneg %p63
        $region22: #{tpu_custom_call.1} parent=15 // pred_check_branch
          %138 = sbr.rel (%p136) target = $region24
        $region23: #{tpu_custom_call.1} parent=15 // pred_region
          %s139 = sand.u32 %s53, 1
          %s140 = scalar_lea.sflag [#allocation6], %s139
          %s141 = sand.u32 %s53, 1
          %s142 = smul.addr %s141, 64
          %s143 = scalar_lea.vmem [#allocation5], %s142
          %s144 = smul.u32 4, %s17
          %s146 = ssub.s32 1024, 1024
          %147 = vsyncadd %s140, %s146
          %s148 = smul.addr %s144, 2
          %s149 = smul.addr %s148, 128
          %s150 = scalar_lea.hbm %s1, %s149
          %s151 = sshll.u32 %s143, 4
          %s152 = int_to_ptr.vmem [resolvable:$true] %s151
          %157 = dma.hbm_to_vmem [thread:$0]  %s150, 1024, %s152, %s140, 128, 128, 8
        $region24: #{tpu_custom_call.1} parent=15 // pred_fallthru
          _
      $region16: #{tpu_custom_call.1} parent=5 // pred_fallthru
        _
      %p158 = scmp.le.s32.totalorder 1, %s17
      %p159 = scmp.lt.s32.totalorder %s17, 3
      %p160 = pnand %p158, %p159
      %p161 = pneg %p160
      // Predicated region
      $region25: #{tpu_custom_call.1} parent=5 // pred_check
        _
      $region26: #{tpu_custom_call.1} parent=5 // pred_check_branch
        %163 = sbr.rel (%p160) target = $region28
      $region27: #{tpu_custom_call.1} parent=5 // pred_region
        %s164 = ssub.s32 %s17, 1
        %s165 = sand.u32 %s30, 1
        %s166 = scalar_lea.sflag [#allocation3], %s165
        %s167 = sand.u32 %s30, 1
        %s168 = smul.addr %s167, 64
        %s169 = scalar_lea.vmem [#allocation2], %s168
        // Predicated region
        $region29: #{tpu_custom_call.1} parent=27 // pred_check
          %p170 = pneg %p43
        $region30: #{tpu_custom_call.1} parent=27 // pred_check_branch
          %172 = sbr.rel (%p170) target = $region32
        $region31: #{tpu_custom_call.1} parent=27 // pred_region
          %173 = dma.done %s166, 1024
        $region32: #{tpu_custom_call.1} parent=27 // pred_fallthru
          _
        %s174 = sand.u32 %s56, 1
        %s175 = scalar_lea.sflag [#allocation6], %s174
        %s176 = sand.u32 %s56, 1
        %s177 = smul.addr %s176, 64
        %s178 = scalar_lea.vmem [#allocation5], %s177
        // Predicated region
        $region33: #{tpu_custom_call.1} parent=27 // pred_check
          %p179 = pneg %p69
        $region34: #{tpu_custom_call.1} parent=27 // pred_check_branch
          %181 = sbr.rel (%p179) target = $region36
        $region35: #{tpu_custom_call.1} parent=27 // pred_region
          %182 = dma.done %s175, 1024
        $region36: #{tpu_custom_call.1} parent=27 // pred_fallthru
          _
        %s183 = sand.u32 %s30, 1
        %s184 = scalar_lea.sflag [#allocation3], %s183
        %s185 = sand.u32 %s30, 1
        %s186 = smul.addr %s185, 64
        %s187 = scalar_lea.vmem [#allocation2], %s186
        %p188 = pneg %p43
        %p189 = pneg %p40
        %s190 = sand.u32 %s56, 1
        %s191 = scalar_lea.sflag [#allocation6], %s190
        %s192 = sand.u32 %s56, 1
        %s193 = smul.addr %s192, 64
        %s194 = scalar_lea.vmem [#allocation5], %s193
        %p195 = pneg %p69
        %p196 = pneg %p66
        %p197 = pneg %p95
        %p198 = pneg %p92
        %s199 = sand.u32 %s82, 1
        %s200 = scalar_lea.sflag [#allocation4], %s199
        %s201 = sand.u32 %s82, 1
        %s202 = smul.addr %s201, 64
        %s203 = scalar_lea.vmem [#allocation7], %s202
        %s204 = smul.u32 4, %s22
        %s205 = smul.u32 4, %s22
        %s206 = smul.u32 4, %s22
        %v207 = vld [vmem:[%s169] sm:$0xff]
        %v208 = vld [vmem:[%s169 + $0x8] sm:$0xff]
        %v209 = vld [vmem:[%s169 + $0x10] sm:$0xff]
        %v210 = vld [vmem:[%s169 + $0x18] sm:$0xff]
        %v211 = vld [vmem:[%s169 + $0x20] sm:$0xff]
        %v212 = vld [vmem:[%s169 + $0x28] sm:$0xff]
        %v213 = vld [vmem:[%s169 + $0x30] sm:$0xff]
        %v214 = vld [vmem:[%s169 + $0x38] sm:$0xff]
        %v215 = vld [vmem:[%s178] sm:$0xff]
        %v216 = vld [vmem:[%s178 + $0x8] sm:$0xff]
        %v217 = vld [vmem:[%s178 + $0x10] sm:$0xff]
        %v218 = vld [vmem:[%s178 + $0x18] sm:$0xff]
        %v219 = vld [vmem:[%s178 + $0x20] sm:$0xff]
        %v220 = vld [vmem:[%s178 + $0x28] sm:$0xff]
        %v221 = vld [vmem:[%s178 + $0x30] sm:$0xff]
        %v222 = vld [vmem:[%s178 + $0x38] sm:$0xff]
        %v223 = vlaneseq
        %v224 = vshrl.u32 %v223, 7
        %v225 = vadd.s32 %v224, 8
        %v226 = vlaneseq
        %v227 = vand.u32 %v226, 127
        %vm228 = vcmp.eq.s32.totalorder %v224, 0
        %vm229 = vcmp.eq.s32.totalorder %v225, 0
        %vm230 = vcmp.eq.s32.totalorder %v224, 15
        %vm231 = vcmp.eq.s32.totalorder %v225, 15
        %vm232 = vcmp.eq.s32.totalorder %v227, 0
        %vm233 = vcmp.eq.s32.totalorder %v227, 15
        %v234 = vrot.slane %v207, 7
        %v235 = vrot.slane %v209, 7
        %v236 = vrot.slane %v211, 7
        %v237 = vrot.slane %v213, 7
        %v238 = vrot.slane %v208, 7
        %v239 = vrot.slane %v210, 7
        %v240 = vrot.slane %v212, 7
        %v241 = vrot.slane %v214, 7
        %vm242 = vcmp.lt.s32.totalorder %v224, 1
        %v243 = vsel %vm242, %v234, %v238
        %v244 = vsel %vm242, %v235, %v239
        %v245 = vsel %vm242, %v236, %v240
        %v246 = vsel %vm242, %v237, %v241
        %v247 = vsel %vm242, %v238, %v234
        %v248 = vsel %vm242, %v239, %v235
        %v249 = vsel %vm242, %v240, %v236
        %v250 = vsel %vm242, %v241, %v237
        %v251 = vrot.slane %v207, 1
        %v252 = vrot.slane %v209, 1
        %v253 = vrot.slane %v211, 1
        %v254 = vrot.slane %v213, 1
        %v255 = vrot.slane %v208, 1
        %v256 = vrot.slane %v210, 1
        %v257 = vrot.slane %v212, 1
        %v258 = vrot.slane %v214, 1
        %vm259 = vcmp.lt.s32.totalorder %v224, 7
        %v260 = vsel %vm259, %v251, %v255
        %v261 = vsel %vm259, %v252, %v256
        %v262 = vsel %vm259, %v253, %v257
        %v263 = vsel %vm259, %v254, %v258
        %v264 = vsel %vm259, %v255, %v251
        %v265 = vsel %vm259, %v256, %v252
        %v266 = vsel %vm259, %v257, %v253
        %v267 = vsel %vm259, %v258, %v254
        %v268 = vsel %vm228, %v260, %v247
        %v269 = vsel %vm229, %v264, %v243
        %v270 = vsel %vm228, %v261, %v248
        %v271 = vsel %vm229, %v265, %v244
        %v272 = vsel %vm228, %v262, %v249
        %v273 = vsel %vm229, %v266, %v245
        %v274 = vsel %vm228, %v263, %v250
        %v275 = vsel %vm229, %v267, %v246
        %v276 = vsel %vm230, %v247, %v260
        %v277 = vsel %vm231, %v243, %v264
        %v278 = vsel %vm230, %v248, %v261
        %v279 = vsel %vm231, %v244, %v265
        %v280 = vsel %vm230, %v249, %v262
        %v281 = vsel %vm231, %v245, %v266
        %v282 = vsel %vm230, %v250, %v263
        %v283 = vsel %vm231, %v246, %v267
        %v284 = vadd.f32 %v268, %v207
        %v285 = vadd.f32 %v269, %v208
        %v286 = vadd.f32 %v270, %v209
        %v287 = vadd.f32 %v271, %v210
        %v288 = vadd.f32 %v272, %v211
        %v289 = vadd.f32 %v273, %v212
        %v290 = vadd.f32 %v274, %v213
        %v291 = vadd.f32 %v275, %v214
        %v292 = vadd.f32 %v284, %v276
        %v293 = vadd.f32 %v285, %v277
        %v294 = vadd.f32 %v286, %v278
        %v295 = vadd.f32 %v287, %v279
        %v296 = vadd.f32 %v288, %v280
        %v297 = vadd.f32 %v289, %v281
        %v298 = vadd.f32 %v290, %v282
        %v299 = vadd.f32 %v291, %v283
        %vm300 = vcmask 1047680
        %301 = vrot.lane.b32.xlu0 %v292, 16
        %v302 = vpop.permute.xlu0 %301
        %v303 = vsel %vm300, %v302, %v292
        %304 = vrot.lane.b32.xlu0 %v293, 16
        %v305 = vpop.permute.xlu0 %304
        %v306 = vsel %vm300, %v305, %v293
        %307 = vrot.lane.b32.xlu0 %v294, 16
        %v308 = vpop.permute.xlu0 %307
        %v309 = vsel %vm300, %v308, %v294
        %310 = vrot.lane.b32.xlu0 %v295, 16
        %v311 = vpop.permute.xlu0 %310
        %v312 = vsel %vm300, %v311, %v295
        %313 = vrot.lane.b32.xlu0 %v296, 16
        %v314 = vpop.permute.xlu0 %313
        %v315 = vsel %vm300, %v314, %v296
        %316 = vrot.lane.b32.xlu0 %v297, 16
        %v317 = vpop.permute.xlu0 %316
        %v318 = vsel %vm300, %v317, %v297
        %319 = vrot.lane.b32.xlu0 %v298, 16
        %v320 = vpop.permute.xlu0 %319
        %v321 = vsel %vm300, %v320, %v298
        %322 = vrot.lane.b32.xlu0 %v299, 16
        %v323 = vpop.permute.xlu0 %322
        %v324 = vsel %vm300, %v323, %v299
        %325 = vrot.lane.b32.xlu0 %v303, 16
        %v326 = vpop.permute.xlu0 %325
        %327 = vrot.lane.b32.xlu0 %v306, 16
        %v328 = vpop.permute.xlu0 %327
        %329 = vrot.lane.b32.xlu0 %v309, 16
        %v330 = vpop.permute.xlu0 %329
        %331 = vrot.lane.b32.xlu0 %v312, 16
        %v332 = vpop.permute.xlu0 %331
        %333 = vrot.lane.b32.xlu0 %v315, 16
        %v334 = vpop.permute.xlu0 %333
        %335 = vrot.lane.b32.xlu0 %v318, 16
        %v336 = vpop.permute.xlu0 %335
        %337 = vrot.lane.b32.xlu0 %v321, 16
        %v338 = vpop.permute.xlu0 %337
        %339 = vrot.lane.b32.xlu0 %v324, 16
        %v340 = vpop.permute.xlu0 %339
        %v341 = vsel %vm300, %v326, %v292
        %v342 = vsel %vm300, %v328, %v293
        %v343 = vsel %vm300, %v330, %v294
        %v344 = vsel %vm300, %v332, %v295
        %v345 = vsel %vm300, %v334, %v296
        %v346 = vsel %vm300, %v336, %v297
        %v347 = vsel %vm300, %v338, %v298
        %v348 = vsel %vm300, %v340, %v299
        %357 = vrot.lane.b32.xlu0 %v341, 127
        %v358 = vpop.permute.xlu0 %357
        %359 = vrot.lane.b32.xlu0 %v342, 127
        %v360 = vpop.permute.xlu0 %359
        %361 = vrot.lane.b32.xlu0 %v343, 127
        %v362 = vpop.permute.xlu0 %361
        %363 = vrot.lane.b32.xlu0 %v344, 127
        %v364 = vpop.permute.xlu0 %363
        %365 = vrot.lane.b32.xlu0 %v345, 127
        %v366 = vpop.permute.xlu0 %365
        %367 = vrot.lane.b32.xlu0 %v346, 127
        %v368 = vpop.permute.xlu0 %367
        %369 = vrot.lane.b32.xlu0 %v347, 127
        %v370 = vpop.permute.xlu0 %369
        %371 = vrot.lane.b32.xlu0 %v348, 127
        %v372 = vpop.permute.xlu0 %371
        %381 = vrot.lane.b32.xlu0 %v341, 113
        %v382 = vpop.permute.xlu0 %381
        %383 = vrot.lane.b32.xlu0 %v342, 113
        %v384 = vpop.permute.xlu0 %383
        %385 = vrot.lane.b32.xlu0 %v343, 113
        %v386 = vpop.permute.xlu0 %385
        %387 = vrot.lane.b32.xlu0 %v344, 113
        %v388 = vpop.permute.xlu0 %387
        %389 = vrot.lane.b32.xlu0 %v345, 113
        %v390 = vpop.permute.xlu0 %389
        %391 = vrot.lane.b32.xlu0 %v346, 113
        %v392 = vpop.permute.xlu0 %391
        %393 = vrot.lane.b32.xlu0 %v347, 113
        %v394 = vpop.permute.xlu0 %393
        %395 = vrot.lane.b32.xlu0 %v348, 113
        %v396 = vpop.permute.xlu0 %395
        %v405 = vsel %vm232, %v358, %v382
        %v406 = vsel %vm232, %v360, %v384
        %v407 = vsel %vm232, %v362, %v386
        %v408 = vsel %vm232, %v364, %v388
        %v409 = vsel %vm232, %v366, %v390
        %v410 = vsel %vm232, %v368, %v392
        %v411 = vsel %vm232, %v370, %v394
        %v412 = vsel %vm232, %v372, %v396
        %v413 = vsel %vm233, %v382, %v358
        %v414 = vsel %vm233, %v384, %v360
        %v415 = vsel %vm233, %v386, %v362
        %v416 = vsel %vm233, %v388, %v364
        %v417 = vsel %vm233, %v390, %v366
        %v418 = vsel %vm233, %v392, %v368
        %v419 = vsel %vm233, %v394, %v370
        %v420 = vsel %vm233, %v396, %v372
        %v421 = vadd.f32 %v405, %v292
        %v422 = vadd.f32 %v406, %v293
        %v423 = vadd.f32 %v407, %v294
        %v424 = vadd.f32 %v408, %v295
        %v425 = vadd.f32 %v409, %v296
        %v426 = vadd.f32 %v410, %v297
        %v427 = vadd.f32 %v411, %v298
        %v428 = vadd.f32 %v412, %v299
        %v429 = vadd.f32 %v421, %v413
        %v430 = vadd.f32 %v422, %v414
        %v431 = vadd.f32 %v423, %v415
        %v432 = vadd.f32 %v424, %v416
        %v433 = vadd.f32 %v425, %v417
        %v434 = vadd.f32 %v426, %v418
        %v435 = vadd.f32 %v427, %v419
        %v436 = vadd.f32 %v428, %v420
        %v437 = vmul.f32 %v429, 0.11111111
        %v438 = vmul.f32 %v430, 0.11111111
        %v439 = vmul.f32 %v431, 0.11111111
        %v440 = vmul.f32 %v432, 0.11111111
        %v441 = vmul.f32 %v433, 0.11111111
        %v442 = vmul.f32 %v434, 0.11111111
        %v443 = vmul.f32 %v435, 0.11111111
        %v444 = vmul.f32 %v436, 0.11111111
        %v445 = vrot.slane %v215, 7
        %v446 = vrot.slane %v217, 7
        %v447 = vrot.slane %v219, 7
        %v448 = vrot.slane %v221, 7
        %v449 = vrot.slane %v216, 7
        %v450 = vrot.slane %v218, 7
        %v451 = vrot.slane %v220, 7
        %v452 = vrot.slane %v222, 7
        %v453 = vsel %vm242, %v445, %v449
        %v454 = vsel %vm242, %v446, %v450
        %v455 = vsel %vm242, %v447, %v451
        %v456 = vsel %vm242, %v448, %v452
        %v457 = vsel %vm242, %v449, %v445
        %v458 = vsel %vm242, %v450, %v446
        %v459 = vsel %vm242, %v451, %v447
        %v460 = vsel %vm242, %v452, %v448
        %v461 = vrot.slane %v215, 1
        %v462 = vrot.slane %v217, 1
        %v463 = vrot.slane %v219, 1
        %v464 = vrot.slane %v221, 1
        %v465 = vrot.slane %v216, 1
        %v466 = vrot.slane %v218, 1
        %v467 = vrot.slane %v220, 1
        %v468 = vrot.slane %v222, 1
        %v469 = vsel %vm259, %v461, %v465
        %v470 = vsel %vm259, %v462, %v466
        %v471 = vsel %vm259, %v463, %v467
        %v472 = vsel %vm259, %v464, %v468
        %v473 = vsel %vm259, %v465, %v461
        %v474 = vsel %vm259, %v466, %v462
        %v475 = vsel %vm259, %v467, %v463
        %v476 = vsel %vm259, %v468, %v464
        %v477 = vsel %vm228, %v469, %v457
        %v478 = vsel %vm229, %v473, %v453
        %v479 = vsel %vm228, %v470, %v458
        %v480 = vsel %vm229, %v474, %v454
        %v481 = vsel %vm228, %v471, %v459
        %v482 = vsel %vm229, %v475, %v455
        %v483 = vsel %vm228, %v472, %v460
        %v484 = vsel %vm229, %v476, %v456
        %v485 = vsel %vm230, %v457, %v469
        %v486 = vsel %vm231, %v453, %v473
        %v487 = vsel %vm230, %v458, %v470
        %v488 = vsel %vm231, %v454, %v474
        %v489 = vsel %vm230, %v459, %v471
        %v490 = vsel %vm231, %v455, %v475
        %v491 = vsel %vm230, %v460, %v472
        %v492 = vsel %vm231, %v456, %v476
        %v493 = vadd.f32 %v477, %v215
        %v494 = vadd.f32 %v478, %v216
        %v495 = vadd.f32 %v479, %v217
        %v496 = vadd.f32 %v480, %v218
        %v497 = vadd.f32 %v481, %v219
        %v498 = vadd.f32 %v482, %v220
        %v499 = vadd.f32 %v483, %v221
        %v500 = vadd.f32 %v484, %v222
        %v501 = vadd.f32 %v493, %v485
        %v502 = vadd.f32 %v494, %v486
        %v503 = vadd.f32 %v495, %v487
        %v504 = vadd.f32 %v496, %v488
        %v505 = vadd.f32 %v497, %v489
        %v506 = vadd.f32 %v498, %v490
        %v507 = vadd.f32 %v499, %v491
        %v508 = vadd.f32 %v500, %v492
        %509 = vrot.lane.b32.xlu0 %v501, 16
        %v510 = vpop.permute.xlu0 %509
        %v511 = vsel %vm300, %v510, %v501
        %512 = vrot.lane.b32.xlu0 %v502, 16
        %v513 = vpop.permute.xlu0 %512
        %v514 = vsel %vm300, %v513, %v502
        %515 = vrot.lane.b32.xlu0 %v503, 16
        %v516 = vpop.permute.xlu0 %515
        %v517 = vsel %vm300, %v516, %v503
        %518 = vrot.lane.b32.xlu0 %v504, 16
        %v519 = vpop.permute.xlu0 %518
        %v520 = vsel %vm300, %v519, %v504
        %521 = vrot.lane.b32.xlu0 %v505, 16
        %v522 = vpop.permute.xlu0 %521
        %v523 = vsel %vm300, %v522, %v505
        %524 = vrot.lane.b32.xlu0 %v506, 16
        %v525 = vpop.permute.xlu0 %524
        %v526 = vsel %vm300, %v525, %v506
        %527 = vrot.lane.b32.xlu0 %v507, 16
        %v528 = vpop.permute.xlu0 %527
        %v529 = vsel %vm300, %v528, %v507
        %530 = vrot.lane.b32.xlu0 %v508, 16
        %v531 = vpop.permute.xlu0 %530
        %v532 = vsel %vm300, %v531, %v508
        %533 = vrot.lane.b32.xlu0 %v511, 16
        %v534 = vpop.permute.xlu0 %533
        %535 = vrot.lane.b32.xlu0 %v514, 16
        %v536 = vpop.permute.xlu0 %535
        %537 = vrot.lane.b32.xlu0 %v517, 16
        %v538 = vpop.permute.xlu0 %537
        %539 = vrot.lane.b32.xlu0 %v520, 16
        %v540 = vpop.permute.xlu0 %539
        %541 = vrot.lane.b32.xlu0 %v523, 16
        %v542 = vpop.permute.xlu0 %541
        %543 = vrot.lane.b32.xlu0 %v526, 16
        %v544 = vpop.permute.xlu0 %543
        %545 = vrot.lane.b32.xlu0 %v529, 16
        %v546 = vpop.permute.xlu0 %545
        %547 = vrot.lane.b32.xlu0 %v532, 16
        %v548 = vpop.permute.xlu0 %547
        %v549 = vsel %vm300, %v534, %v501
        %v550 = vsel %vm300, %v536, %v502
        %v551 = vsel %vm300, %v538, %v503
        %v552 = vsel %vm300, %v540, %v504
        %v553 = vsel %vm300, %v542, %v505
        %v554 = vsel %vm300, %v544, %v506
        %v555 = vsel %vm300, %v546, %v507
        %v556 = vsel %vm300, %v548, %v508
        %565 = vrot.lane.b32.xlu0 %v549, 127
        %v566 = vpop.permute.xlu0 %565
        %567 = vrot.lane.b32.xlu0 %v550, 127
        %v568 = vpop.permute.xlu0 %567
        %569 = vrot.lane.b32.xlu0 %v551, 127
        %v570 = vpop.permute.xlu0 %569
        %571 = vrot.lane.b32.xlu0 %v552, 127
        %v572 = vpop.permute.xlu0 %571
        %573 = vrot.lane.b32.xlu0 %v553, 127
        %v574 = vpop.permute.xlu0 %573
        %575 = vrot.lane.b32.xlu0 %v554, 127
        %v576 = vpop.permute.xlu0 %575
        %577 = vrot.lane.b32.xlu0 %v555, 127
        %v578 = vpop.permute.xlu0 %577
        %579 = vrot.lane.b32.xlu0 %v556, 127
        %v580 = vpop.permute.xlu0 %579
        %589 = vrot.lane.b32.xlu0 %v549, 113
        %v590 = vpop.permute.xlu0 %589
        %591 = vrot.lane.b32.xlu0 %v550, 113
        %v592 = vpop.permute.xlu0 %591
        %593 = vrot.lane.b32.xlu0 %v551, 113
        %v594 = vpop.permute.xlu0 %593
        %595 = vrot.lane.b32.xlu0 %v552, 113
        %v596 = vpop.permute.xlu0 %595
        %597 = vrot.lane.b32.xlu0 %v553, 113
        %v598 = vpop.permute.xlu0 %597
        %599 = vrot.lane.b32.xlu0 %v554, 113
        %v600 = vpop.permute.xlu0 %599
        %601 = vrot.lane.b32.xlu0 %v555, 113
        %v602 = vpop.permute.xlu0 %601
        %603 = vrot.lane.b32.xlu0 %v556, 113
        %v604 = vpop.permute.xlu0 %603
        %v613 = vsel %vm232, %v566, %v590
        %v614 = vsel %vm232, %v568, %v592
        %v615 = vsel %vm232, %v570, %v594
        %v616 = vsel %vm232, %v572, %v596
        %v617 = vsel %vm232, %v574, %v598
        %v618 = vsel %vm232, %v576, %v600
        %v619 = vsel %vm232, %v578, %v602
        %v620 = vsel %vm232, %v580, %v604
        %v621 = vsel %vm233, %v590, %v566
        %v622 = vsel %vm233, %v592, %v568
        %v623 = vsel %vm233, %v594, %v570
        %v624 = vsel %vm233, %v596, %v572
        %v625 = vsel %vm233, %v598, %v574
        %v626 = vsel %vm233, %v600, %v576
        %v627 = vsel %vm233, %v602, %v578
        %v628 = vsel %vm233, %v604, %v580
        %v629 = vadd.f32 %v613, %v501
        %v630 = vadd.f32 %v614, %v502
        %v631 = vadd.f32 %v615, %v503
        %v632 = vadd.f32 %v616, %v504
        %v633 = vadd.f32 %v617, %v505
        %v634 = vadd.f32 %v618, %v506
        %v635 = vadd.f32 %v619, %v507
        %v636 = vadd.f32 %v620, %v508
        %v637 = vadd.f32 %v629, %v621
        %v638 = vadd.f32 %v630, %v622
        %v639 = vadd.f32 %v631, %v623
        %v640 = vadd.f32 %v632, %v624
        %v641 = vadd.f32 %v633, %v625
        %v642 = vadd.f32 %v634, %v626
        %v643 = vadd.f32 %v635, %v627
        %v644 = vadd.f32 %v636, %v628
        %v645 = vmul.f32 %v637, 0.11111111
        %v646 = vmul.f32 %v638, 0.11111111
        %v647 = vmul.f32 %v639, 0.11111111
        %v648 = vmul.f32 %v640, 0.11111111
        %v649 = vmul.f32 %v641, 0.11111111
        %v650 = vmul.f32 %v642, 0.11111111
        %v651 = vmul.f32 %v643, 0.11111111
        %v652 = vmul.f32 %v644, 0.11111111
        %v653 = vmul.f32 %v207, %v207
        %v654 = vmul.f32 %v208, %v208
        %v655 = vmul.f32 %v209, %v209
        %v656 = vmul.f32 %v210, %v210
        %v657 = vmul.f32 %v211, %v211
        %v658 = vmul.f32 %v212, %v212
        %v659 = vmul.f32 %v213, %v213
        %v660 = vmul.f32 %v214, %v214
        %v661 = vrot.slane %v653, 7
        %v662 = vrot.slane %v655, 7
        %v663 = vrot.slane %v657, 7
        %v664 = vrot.slane %v659, 7
        %v665 = vrot.slane %v654, 7
        %v666 = vrot.slane %v656, 7
        %v667 = vrot.slane %v658, 7
        %v668 = vrot.slane %v660, 7
        %v669 = vsel %vm242, %v661, %v665
        %v670 = vsel %vm242, %v662, %v666
        %v671 = vsel %vm242, %v663, %v667
        %v672 = vsel %vm242, %v664, %v668
        %v673 = vsel %vm242, %v665, %v661
        %v674 = vsel %vm242, %v666, %v662
        %v675 = vsel %vm242, %v667, %v663
        %v676 = vsel %vm242, %v668, %v664
        %v677 = vrot.slane %v653, 1
        %v678 = vrot.slane %v655, 1
        %v679 = vrot.slane %v657, 1
        %v680 = vrot.slane %v659, 1
        %v681 = vrot.slane %v654, 1
        %v682 = vrot.slane %v656, 1
        %v683 = vrot.slane %v658, 1
        %v684 = vrot.slane %v660, 1
        %v685 = vsel %vm259, %v677, %v681
        %v686 = vsel %vm259, %v678, %v682
        %v687 = vsel %vm259, %v679, %v683
        %v688 = vsel %vm259, %v680, %v684
        %v689 = vsel %vm259, %v681, %v677
        %v690 = vsel %vm259, %v682, %v678
        %v691 = vsel %vm259, %v683, %v679
        %v692 = vsel %vm259, %v684, %v680
        %v693 = vsel %vm228, %v685, %v673
        %v694 = vsel %vm229, %v689, %v669
        %v695 = vsel %vm228, %v686, %v674
        %v696 = vsel %vm229, %v690, %v670
        %v697 = vsel %vm228, %v687, %v675
        %v698 = vsel %vm229, %v691, %v671
        %v699 = vsel %vm228, %v688, %v676
        %v700 = vsel %vm229, %v692, %v672
        %v701 = vsel %vm230, %v673, %v685
        %v702 = vsel %vm231, %v669, %v689
        %v703 = vsel %vm230, %v674, %v686
        %v704 = vsel %vm231, %v670, %v690
        %v705 = vsel %vm230, %v675, %v687
        %v706 = vsel %vm231, %v671, %v691
        %v707 = vsel %vm230, %v676, %v688
        %v708 = vsel %vm231, %v672, %v692
        %v709 = vadd.f32 %v693, %v653
        %v710 = vadd.f32 %v694, %v654
        %v711 = vadd.f32 %v695, %v655
        %v712 = vadd.f32 %v696, %v656
        %v713 = vadd.f32 %v697, %v657
        %v714 = vadd.f32 %v698, %v658
        %v715 = vadd.f32 %v699, %v659
        %v716 = vadd.f32 %v700, %v660
        %v717 = vadd.f32 %v709, %v701
        %v718 = vadd.f32 %v710, %v702
        %v719 = vadd.f32 %v711, %v703
        %v720 = vadd.f32 %v712, %v704
        %v721 = vadd.f32 %v713, %v705
        %v722 = vadd.f32 %v714, %v706
        %v723 = vadd.f32 %v715, %v707
        %v724 = vadd.f32 %v716, %v708
        %725 = vrot.lane.b32.xlu0 %v717, 16
        %v726 = vpop.permute.xlu0 %725
        %v727 = vsel %vm300, %v726, %v717
        %728 = vrot.lane.b32.xlu0 %v718, 16
        %v729 = vpop.permute.xlu0 %728
        %v730 = vsel %vm300, %v729, %v718
        %731 = vrot.lane.b32.xlu0 %v719, 16
        %v732 = vpop.permute.xlu0 %731
        %v733 = vsel %vm300, %v732, %v719
        %734 = vrot.lane.b32.xlu0 %v720, 16
        %v735 = vpop.permute.xlu0 %734
        %v736 = vsel %vm300, %v735, %v720
        %737 = vrot.lane.b32.xlu0 %v721, 16
        %v738 = vpop.permute.xlu0 %737
        %v739 = vsel %vm300, %v738, %v721
        %740 = vrot.lane.b32.xlu0 %v722, 16
        %v741 = vpop.permute.xlu0 %740
        %v742 = vsel %vm300, %v741, %v722
        %743 = vrot.lane.b32.xlu0 %v723, 16
        %v744 = vpop.permute.xlu0 %743
        %v745 = vsel %vm300, %v744, %v723
        %746 = vrot.lane.b32.xlu0 %v724, 16
        %v747 = vpop.permute.xlu0 %746
        %v748 = vsel %vm300, %v747, %v724
        %749 = vrot.lane.b32.xlu0 %v727, 16
        %v750 = vpop.permute.xlu0 %749
        %751 = vrot.lane.b32.xlu0 %v730, 16
        %v752 = vpop.permute.xlu0 %751
        %753 = vrot.lane.b32.xlu0 %v733, 16
        %v754 = vpop.permute.xlu0 %753
        %755 = vrot.lane.b32.xlu0 %v736, 16
        %v756 = vpop.permute.xlu0 %755
        %757 = vrot.lane.b32.xlu0 %v739, 16
        %v758 = vpop.permute.xlu0 %757
        %759 = vrot.lane.b32.xlu0 %v742, 16
        %v760 = vpop.permute.xlu0 %759
        %761 = vrot.lane.b32.xlu0 %v745, 16
        %v762 = vpop.permute.xlu0 %761
        %763 = vrot.lane.b32.xlu0 %v748, 16
        %v764 = vpop.permute.xlu0 %763
        %v765 = vsel %vm300, %v750, %v717
        %v766 = vsel %vm300, %v752, %v718
        %v767 = vsel %vm300, %v754, %v719
        %v768 = vsel %vm300, %v756, %v720
        %v769 = vsel %vm300, %v758, %v721
        %v770 = vsel %vm300, %v760, %v722
        %v771 = vsel %vm300, %v762, %v723
        %v772 = vsel %vm300, %v764, %v724
        %781 = vrot.lane.b32.xlu0 %v765, 127
        %v782 = vpop.permute.xlu0 %781
        %783 = vrot.lane.b32.xlu0 %v766, 127
        %v784 = vpop.permute.xlu0 %783
        %785 = vrot.lane.b32.xlu0 %v767, 127
        %v786 = vpop.permute.xlu0 %785
        %787 = vrot.lane.b32.xlu0 %v768, 127
        %v788 = vpop.permute.xlu0 %787
        %789 = vrot.lane.b32.xlu0 %v769, 127
        %v790 = vpop.permute.xlu0 %789
        %791 = vrot.lane.b32.xlu0 %v770, 127
        %v792 = vpop.permute.xlu0 %791
        %793 = vrot.lane.b32.xlu0 %v771, 127
        %v794 = vpop.permute.xlu0 %793
        %795 = vrot.lane.b32.xlu0 %v772, 127
        %v796 = vpop.permute.xlu0 %795
        %805 = vrot.lane.b32.xlu0 %v765, 113
        %v806 = vpop.permute.xlu0 %805
        %807 = vrot.lane.b32.xlu0 %v766, 113
        %v808 = vpop.permute.xlu0 %807
        %809 = vrot.lane.b32.xlu0 %v767, 113
        %v810 = vpop.permute.xlu0 %809
        %811 = vrot.lane.b32.xlu0 %v768, 113
        %v812 = vpop.permute.xlu0 %811
        %813 = vrot.lane.b32.xlu0 %v769, 113
        %v814 = vpop.permute.xlu0 %813
        %815 = vrot.lane.b32.xlu0 %v770, 113
        %v816 = vpop.permute.xlu0 %815
        %817 = vrot.lane.b32.xlu0 %v771, 113
        %v818 = vpop.permute.xlu0 %817
        %819 = vrot.lane.b32.xlu0 %v772, 113
        %v820 = vpop.permute.xlu0 %819
        %v829 = vsel %vm232, %v782, %v806
        %v830 = vsel %vm232, %v784, %v808
        %v831 = vsel %vm232, %v786, %v810
        %v832 = vsel %vm232, %v788, %v812
        %v833 = vsel %vm232, %v790, %v814
        %v834 = vsel %vm232, %v792, %v816
        %v835 = vsel %vm232, %v794, %v818
        %v836 = vsel %vm232, %v796, %v820
        %v837 = vsel %vm233, %v806, %v782
        %v838 = vsel %vm233, %v808, %v784
        %v839 = vsel %vm233, %v810, %v786
        %v840 = vsel %vm233, %v812, %v788
        %v841 = vsel %vm233, %v814, %v790
        %v842 = vsel %vm233, %v816, %v792
        %v843 = vsel %vm233, %v818, %v794
        %v844 = vsel %vm233, %v820, %v796
        %v845 = vadd.f32 %v829, %v717
        %v846 = vadd.f32 %v830, %v718
        %v847 = vadd.f32 %v831, %v719
        %v848 = vadd.f32 %v832, %v720
        %v849 = vadd.f32 %v833, %v721
        %v850 = vadd.f32 %v834, %v722
        %v851 = vadd.f32 %v835, %v723
        %v852 = vadd.f32 %v836, %v724
        %v853 = vadd.f32 %v845, %v837
        %v854 = vadd.f32 %v846, %v838
        %v855 = vadd.f32 %v847, %v839
        %v856 = vadd.f32 %v848, %v840
        %v857 = vadd.f32 %v849, %v841
        %v858 = vadd.f32 %v850, %v842
        %v859 = vadd.f32 %v851, %v843
        %v860 = vadd.f32 %v852, %v844
        %v861 = vmul.f32 %v853, 0.11111111
        %v862 = vmul.f32 %v854, 0.11111111
        %v863 = vmul.f32 %v855, 0.11111111
        %v864 = vmul.f32 %v856, 0.11111111
        %v865 = vmul.f32 %v857, 0.11111111
        %v866 = vmul.f32 %v858, 0.11111111
        %v867 = vmul.f32 %v859, 0.11111111
        %v868 = vmul.f32 %v860, 0.11111111
        %v869 = vmul.f32 %v437, %v437
        %v870 = vmul.f32 %v438, %v438
        %v871 = vmul.f32 %v439, %v439
        %v872 = vmul.f32 %v440, %v440
        %v873 = vmul.f32 %v441, %v441
        %v874 = vmul.f32 %v442, %v442
        %v875 = vmul.f32 %v443, %v443
        %v876 = vmul.f32 %v444, %v444
        %v877 = vsub.f32 %v861, %v869
        %v878 = vsub.f32 %v862, %v870
        %v879 = vsub.f32 %v863, %v871
        %v880 = vsub.f32 %v864, %v872
        %v881 = vsub.f32 %v865, %v873
        %v882 = vsub.f32 %v866, %v874
        %v883 = vsub.f32 %v867, %v875
        %v884 = vsub.f32 %v868, %v876
        %v885 = vmul.f32 %v215, %v215
        %v886 = vmul.f32 %v216, %v216
        %v887 = vmul.f32 %v217, %v217
        %v888 = vmul.f32 %v218, %v218
        %v889 = vmul.f32 %v219, %v219
        %v890 = vmul.f32 %v220, %v220
        %v891 = vmul.f32 %v221, %v221
        %v892 = vmul.f32 %v222, %v222
        %v893 = vrot.slane %v885, 7
        %v894 = vrot.slane %v887, 7
        %v895 = vrot.slane %v889, 7
        %v896 = vrot.slane %v891, 7
        %v897 = vrot.slane %v886, 7
        %v898 = vrot.slane %v888, 7
        %v899 = vrot.slane %v890, 7
        %v900 = vrot.slane %v892, 7
        %v901 = vsel %vm242, %v893, %v897
        %v902 = vsel %vm242, %v894, %v898
        %v903 = vsel %vm242, %v895, %v899
        %v904 = vsel %vm242, %v896, %v900
        %v905 = vsel %vm242, %v897, %v893
        %v906 = vsel %vm242, %v898, %v894
        %v907 = vsel %vm242, %v899, %v895
        %v908 = vsel %vm242, %v900, %v896
        %v909 = vrot.slane %v885, 1
        %v910 = vrot.slane %v887, 1
        %v911 = vrot.slane %v889, 1
        %v912 = vrot.slane %v891, 1
        %v913 = vrot.slane %v886, 1
        %v914 = vrot.slane %v888, 1
        %v915 = vrot.slane %v890, 1
        %v916 = vrot.slane %v892, 1
        %v917 = vsel %vm259, %v909, %v913
        %v918 = vsel %vm259, %v910, %v914
        %v919 = vsel %vm259, %v911, %v915
        %v920 = vsel %vm259, %v912, %v916
        %v921 = vsel %vm259, %v913, %v909
        %v922 = vsel %vm259, %v914, %v910
        %v923 = vsel %vm259, %v915, %v911
        %v924 = vsel %vm259, %v916, %v912
        %v925 = vsel %vm228, %v917, %v905
        %v926 = vsel %vm229, %v921, %v901
        %v927 = vsel %vm228, %v918, %v906
        %v928 = vsel %vm229, %v922, %v902
        %v929 = vsel %vm228, %v919, %v907
        %v930 = vsel %vm229, %v923, %v903
        %v931 = vsel %vm228, %v920, %v908
        %v932 = vsel %vm229, %v924, %v904
        %v933 = vsel %vm230, %v905, %v917
        %v934 = vsel %vm231, %v901, %v921
        %v935 = vsel %vm230, %v906, %v918
        %v936 = vsel %vm231, %v902, %v922
        %v937 = vsel %vm230, %v907, %v919
        %v938 = vsel %vm231, %v903, %v923
        %v939 = vsel %vm230, %v908, %v920
        %v940 = vsel %vm231, %v904, %v924
        %v941 = vadd.f32 %v925, %v885
        %v942 = vadd.f32 %v926, %v886
        %v943 = vadd.f32 %v927, %v887
        %v944 = vadd.f32 %v928, %v888
        %v945 = vadd.f32 %v929, %v889
        %v946 = vadd.f32 %v930, %v890
        %v947 = vadd.f32 %v931, %v891
        %v948 = vadd.f32 %v932, %v892
        %v949 = vadd.f32 %v941, %v933
        %v950 = vadd.f32 %v942, %v934
        %v951 = vadd.f32 %v943, %v935
        %v952 = vadd.f32 %v944, %v936
        %v953 = vadd.f32 %v945, %v937
        %v954 = vadd.f32 %v946, %v938
        %v955 = vadd.f32 %v947, %v939
        %v956 = vadd.f32 %v948, %v940
        %957 = vrot.lane.b32.xlu0 %v949, 16
        %v958 = vpop.permute.xlu0 %957
        %v959 = vsel %vm300, %v958, %v949
        %960 = vrot.lane.b32.xlu0 %v950, 16
        %v961 = vpop.permute.xlu0 %960
        %v962 = vsel %vm300, %v961, %v950
        %963 = vrot.lane.b32.xlu0 %v951, 16
        %v964 = vpop.permute.xlu0 %963
        %v965 = vsel %vm300, %v964, %v951
        %966 = vrot.lane.b32.xlu0 %v952, 16
        %v967 = vpop.permute.xlu0 %966
        %v968 = vsel %vm300, %v967, %v952
        %969 = vrot.lane.b32.xlu0 %v953, 16
        %v970 = vpop.permute.xlu0 %969
        %v971 = vsel %vm300, %v970, %v953
        %972 = vrot.lane.b32.xlu0 %v954, 16
        %v973 = vpop.permute.xlu0 %972
        %v974 = vsel %vm300, %v973, %v954
        %975 = vrot.lane.b32.xlu0 %v955, 16
        %v976 = vpop.permute.xlu0 %975
        %v977 = vsel %vm300, %v976, %v955
        %978 = vrot.lane.b32.xlu0 %v956, 16
        %v979 = vpop.permute.xlu0 %978
        %v980 = vsel %vm300, %v979, %v956
        %981 = vrot.lane.b32.xlu0 %v959, 16
        %v982 = vpop.permute.xlu0 %981
        %983 = vrot.lane.b32.xlu0 %v962, 16
        %v984 = vpop.permute.xlu0 %983
        %985 = vrot.lane.b32.xlu0 %v965, 16
        %v986 = vpop.permute.xlu0 %985
        %987 = vrot.lane.b32.xlu0 %v968, 16
        %v988 = vpop.permute.xlu0 %987
        %989 = vrot.lane.b32.xlu0 %v971, 16
        %v990 = vpop.permute.xlu0 %989
        %991 = vrot.lane.b32.xlu0 %v974, 16
        %v992 = vpop.permute.xlu0 %991
        %993 = vrot.lane.b32.xlu0 %v977, 16
        %v994 = vpop.permute.xlu0 %993
        %995 = vrot.lane.b32.xlu0 %v980, 16
        %v996 = vpop.permute.xlu0 %995
        %v997 = vsel %vm300, %v982, %v949
        %v998 = vsel %vm300, %v984, %v950
        %v999 = vsel %vm300, %v986, %v951
        %v1000 = vsel %vm300, %v988, %v952
        %v1001 = vsel %vm300, %v990, %v953
        %v1002 = vsel %vm300, %v992, %v954
        %v1003 = vsel %vm300, %v994, %v955
        %v1004 = vsel %vm300, %v996, %v956
        %1013 = vrot.lane.b32.xlu0 %v997, 127
        %v1014 = vpop.permute.xlu0 %1013
        %1015 = vrot.lane.b32.xlu0 %v998, 127
        %v1016 = vpop.permute.xlu0 %1015
        %1017 = vrot.lane.b32.xlu0 %v999, 127
        %v1018 = vpop.permute.xlu0 %1017
        %1019 = vrot.lane.b32.xlu0 %v1000, 127
        %v1020 = vpop.permute.xlu0 %1019
        %1021 = vrot.lane.b32.xlu0 %v1001, 127
        %v1022 = vpop.permute.xlu0 %1021
        %1023 = vrot.lane.b32.xlu0 %v1002, 127
        %v1024 = vpop.permute.xlu0 %1023
        %1025 = vrot.lane.b32.xlu0 %v1003, 127
        %v1026 = vpop.permute.xlu0 %1025
        %1027 = vrot.lane.b32.xlu0 %v1004, 127
        %v1028 = vpop.permute.xlu0 %1027
        %1037 = vrot.lane.b32.xlu0 %v997, 113
        %v1038 = vpop.permute.xlu0 %1037
        %1039 = vrot.lane.b32.xlu0 %v998, 113
        %v1040 = vpop.permute.xlu0 %1039
        %1041 = vrot.lane.b32.xlu0 %v999, 113
        %v1042 = vpop.permute.xlu0 %1041
        %1043 = vrot.lane.b32.xlu0 %v1000, 113
        %v1044 = vpop.permute.xlu0 %1043
        %1045 = vrot.lane.b32.xlu0 %v1001, 113
        %v1046 = vpop.permute.xlu0 %1045
        %1047 = vrot.lane.b32.xlu0 %v1002, 113
        %v1048 = vpop.permute.xlu0 %1047
        %1049 = vrot.lane.b32.xlu0 %v1003, 113
        %v1050 = vpop.permute.xlu0 %1049
        %1051 = vrot.lane.b32.xlu0 %v1004, 113
        %v1052 = vpop.permute.xlu0 %1051
        %v1061 = vsel %vm232, %v1014, %v1038
        %v1062 = vsel %vm232, %v1016, %v1040
        %v1063 = vsel %vm232, %v1018, %v1042
        %v1064 = vsel %vm232, %v1020, %v1044
        %v1065 = vsel %vm232, %v1022, %v1046
        %v1066 = vsel %vm232, %v1024, %v1048
        %v1067 = vsel %vm232, %v1026, %v1050
        %v1068 = vsel %vm232, %v1028, %v1052
        %v1069 = vsel %vm233, %v1038, %v1014
        %v1070 = vsel %vm233, %v1040, %v1016
        %v1071 = vsel %vm233, %v1042, %v1018
        %v1072 = vsel %vm233, %v1044, %v1020
        %v1073 = vsel %vm233, %v1046, %v1022
        %v1074 = vsel %vm233, %v1048, %v1024
        %v1075 = vsel %vm233, %v1050, %v1026
        %v1076 = vsel %vm233, %v1052, %v1028
        %v1077 = vadd.f32 %v1061, %v949
        %v1078 = vadd.f32 %v1062, %v950
        %v1079 = vadd.f32 %v1063, %v951
        %v1080 = vadd.f32 %v1064, %v952
        %v1081 = vadd.f32 %v1065, %v953
        %v1082 = vadd.f32 %v1066, %v954
        %v1083 = vadd.f32 %v1067, %v955
        %v1084 = vadd.f32 %v1068, %v956
        %v1085 = vadd.f32 %v1077, %v1069
        %v1086 = vadd.f32 %v1078, %v1070
        %v1087 = vadd.f32 %v1079, %v1071
        %v1088 = vadd.f32 %v1080, %v1072
        %v1089 = vadd.f32 %v1081, %v1073
        %v1090 = vadd.f32 %v1082, %v1074
        %v1091 = vadd.f32 %v1083, %v1075
        %v1092 = vadd.f32 %v1084, %v1076
        %v1093 = vmul.f32 %v1085, 0.11111111
        %v1094 = vmul.f32 %v1086, 0.11111111
        %v1095 = vmul.f32 %v1087, 0.11111111
        %v1096 = vmul.f32 %v1088, 0.11111111
        %v1097 = vmul.f32 %v1089, 0.11111111
        %v1098 = vmul.f32 %v1090, 0.11111111
        %v1099 = vmul.f32 %v1091, 0.11111111
        %v1100 = vmul.f32 %v1092, 0.11111111
        %v1101 = vmul.f32 %v645, %v645
        %v1102 = vmul.f32 %v646, %v646
        %v1103 = vmul.f32 %v647, %v647
        %v1104 = vmul.f32 %v648, %v648
        %v1105 = vmul.f32 %v649, %v649
        %v1106 = vmul.f32 %v650, %v650
        %v1107 = vmul.f32 %v651, %v651
        %v1108 = vmul.f32 %v652, %v652
        %v1109 = vsub.f32 %v1093, %v1101
        %v1110 = vsub.f32 %v1094, %v1102
        %v1111 = vsub.f32 %v1095, %v1103
        %v1112 = vsub.f32 %v1096, %v1104
        %v1113 = vsub.f32 %v1097, %v1105
        %v1114 = vsub.f32 %v1098, %v1106
        %v1115 = vsub.f32 %v1099, %v1107
        %v1116 = vsub.f32 %v1100, %v1108
        %v1117 = vmul.f32 %v207, %v215
        %v1118 = vmul.f32 %v208, %v216
        %v1119 = vmul.f32 %v209, %v217
        %v1120 = vmul.f32 %v210, %v218
        %v1121 = vmul.f32 %v211, %v219
        %v1122 = vmul.f32 %v212, %v220
        %v1123 = vmul.f32 %v213, %v221
        %v1124 = vmul.f32 %v214, %v222
        %v1125 = vrot.slane %v1117, 7
        %v1126 = vrot.slane %v1119, 7
        %v1127 = vrot.slane %v1121, 7
        %v1128 = vrot.slane %v1123, 7
        %v1129 = vrot.slane %v1118, 7
        %v1130 = vrot.slane %v1120, 7
        %v1131 = vrot.slane %v1122, 7
        %v1132 = vrot.slane %v1124, 7
        %v1133 = vsel %vm242, %v1125, %v1129
        %v1134 = vsel %vm242, %v1126, %v1130
        %v1135 = vsel %vm242, %v1127, %v1131
        %v1136 = vsel %vm242, %v1128, %v1132
        %v1137 = vsel %vm242, %v1129, %v1125
        %v1138 = vsel %vm242, %v1130, %v1126
        %v1139 = vsel %vm242, %v1131, %v1127
        %v1140 = vsel %vm242, %v1132, %v1128
        %v1141 = vrot.slane %v1117, 1
        %v1142 = vrot.slane %v1119, 1
        %v1143 = vrot.slane %v1121, 1
        %v1144 = vrot.slane %v1123, 1
        %v1145 = vrot.slane %v1118, 1
        %v1146 = vrot.slane %v1120, 1
        %v1147 = vrot.slane %v1122, 1
        %v1148 = vrot.slane %v1124, 1
        %v1149 = vsel %vm259, %v1141, %v1145
        %v1150 = vsel %vm259, %v1142, %v1146
        %v1151 = vsel %vm259, %v1143, %v1147
        %v1152 = vsel %vm259, %v1144, %v1148
        %v1153 = vsel %vm259, %v1145, %v1141
        %v1154 = vsel %vm259, %v1146, %v1142
        %v1155 = vsel %vm259, %v1147, %v1143
        %v1156 = vsel %vm259, %v1148, %v1144
        %v1157 = vsel %vm228, %v1149, %v1137
        %v1158 = vsel %vm229, %v1153, %v1133
        %v1159 = vsel %vm228, %v1150, %v1138
        %v1160 = vsel %vm229, %v1154, %v1134
        %v1161 = vsel %vm228, %v1151, %v1139
        %v1162 = vsel %vm229, %v1155, %v1135
        %v1163 = vsel %vm228, %v1152, %v1140
        %v1164 = vsel %vm229, %v1156, %v1136
        %v1165 = vsel %vm230, %v1137, %v1149
        %v1166 = vsel %vm231, %v1133, %v1153
        %v1167 = vsel %vm230, %v1138, %v1150
        %v1168 = vsel %vm231, %v1134, %v1154
        %v1169 = vsel %vm230, %v1139, %v1151
        %v1170 = vsel %vm231, %v1135, %v1155
        %v1171 = vsel %vm230, %v1140, %v1152
        %v1172 = vsel %vm231, %v1136, %v1156
        %v1173 = vadd.f32 %v1157, %v1117
        %v1174 = vadd.f32 %v1158, %v1118
        %v1175 = vadd.f32 %v1159, %v1119
        %v1176 = vadd.f32 %v1160, %v1120
        %v1177 = vadd.f32 %v1161, %v1121
        %v1178 = vadd.f32 %v1162, %v1122
        %v1179 = vadd.f32 %v1163, %v1123
        %v1180 = vadd.f32 %v1164, %v1124
        %v1181 = vadd.f32 %v1173, %v1165
        %v1182 = vadd.f32 %v1174, %v1166
        %v1183 = vadd.f32 %v1175, %v1167
        %v1184 = vadd.f32 %v1176, %v1168
        %v1185 = vadd.f32 %v1177, %v1169
        %v1186 = vadd.f32 %v1178, %v1170
        %v1187 = vadd.f32 %v1179, %v1171
        %v1188 = vadd.f32 %v1180, %v1172
        %1189 = vrot.lane.b32.xlu0 %v1181, 16
        %v1190 = vpop.permute.xlu0 %1189
        %v1191 = vsel %vm300, %v1190, %v1181
        %1192 = vrot.lane.b32.xlu0 %v1182, 16
        %v1193 = vpop.permute.xlu0 %1192
        %v1194 = vsel %vm300, %v1193, %v1182
        %1195 = vrot.lane.b32.xlu0 %v1183, 16
        %v1196 = vpop.permute.xlu0 %1195
        %v1197 = vsel %vm300, %v1196, %v1183
        %1198 = vrot.lane.b32.xlu0 %v1184, 16
        %v1199 = vpop.permute.xlu0 %1198
        %v1200 = vsel %vm300, %v1199, %v1184
        %1201 = vrot.lane.b32.xlu0 %v1185, 16
        %v1202 = vpop.permute.xlu0 %1201
        %v1203 = vsel %vm300, %v1202, %v1185
        %1204 = vrot.lane.b32.xlu0 %v1186, 16
        %v1205 = vpop.permute.xlu0 %1204
        %v1206 = vsel %vm300, %v1205, %v1186
        %1207 = vrot.lane.b32.xlu0 %v1187, 16
        %v1208 = vpop.permute.xlu0 %1207
        %v1209 = vsel %vm300, %v1208, %v1187
        %1210 = vrot.lane.b32.xlu0 %v1188, 16
        %v1211 = vpop.permute.xlu0 %1210
        %v1212 = vsel %vm300, %v1211, %v1188
        %1213 = vrot.lane.b32.xlu0 %v1191, 16
        %v1214 = vpop.permute.xlu0 %1213
        %1215 = vrot.lane.b32.xlu0 %v1194, 16
        %v1216 = vpop.permute.xlu0 %1215
        %1217 = vrot.lane.b32.xlu0 %v1197, 16
        %v1218 = vpop.permute.xlu0 %1217
        %1219 = vrot.lane.b32.xlu0 %v1200, 16
        %v1220 = vpop.permute.xlu0 %1219
        %1221 = vrot.lane.b32.xlu0 %v1203, 16
        %v1222 = vpop.permute.xlu0 %1221
        %1223 = vrot.lane.b32.xlu0 %v1206, 16
        %v1224 = vpop.permute.xlu0 %1223
        %1225 = vrot.lane.b32.xlu0 %v1209, 16
        %v1226 = vpop.permute.xlu0 %1225
        %1227 = vrot.lane.b32.xlu0 %v1212, 16
        %v1228 = vpop.permute.xlu0 %1227
        %v1229 = vsel %vm300, %v1214, %v1181
        %v1230 = vsel %vm300, %v1216, %v1182
        %v1231 = vsel %vm300, %v1218, %v1183
        %v1232 = vsel %vm300, %v1220, %v1184
        %v1233 = vsel %vm300, %v1222, %v1185
        %v1234 = vsel %vm300, %v1224, %v1186
        %v1235 = vsel %vm300, %v1226, %v1187
        %v1236 = vsel %vm300, %v1228, %v1188
        %1245 = vrot.lane.b32.xlu0 %v1229, 127
        %v1246 = vpop.permute.xlu0 %1245
        %1247 = vrot.lane.b32.xlu0 %v1230, 127
        %v1248 = vpop.permute.xlu0 %1247
        %1249 = vrot.lane.b32.xlu0 %v1231, 127
        %v1250 = vpop.permute.xlu0 %1249
        %1251 = vrot.lane.b32.xlu0 %v1232, 127
        %v1252 = vpop.permute.xlu0 %1251
        %1253 = vrot.lane.b32.xlu0 %v1233, 127
        %v1254 = vpop.permute.xlu0 %1253
        %1255 = vrot.lane.b32.xlu0 %v1234, 127
        %v1256 = vpop.permute.xlu0 %1255
        %1257 = vrot.lane.b32.xlu0 %v1235, 127
        %v1258 = vpop.permute.xlu0 %1257
        %1259 = vrot.lane.b32.xlu0 %v1236, 127
        %v1260 = vpop.permute.xlu0 %1259
        %1269 = vrot.lane.b32.xlu0 %v1229, 113
        %v1270 = vpop.permute.xlu0 %1269
        %1271 = vrot.lane.b32.xlu0 %v1230, 113
        %v1272 = vpop.permute.xlu0 %1271
        %1273 = vrot.lane.b32.xlu0 %v1231, 113
        %v1274 = vpop.permute.xlu0 %1273
        %1275 = vrot.lane.b32.xlu0 %v1232, 113
        %v1276 = vpop.permute.xlu0 %1275
        %1277 = vrot.lane.b32.xlu0 %v1233, 113
        %v1278 = vpop.permute.xlu0 %1277
        %1279 = vrot.lane.b32.xlu0 %v1234, 113
        %v1280 = vpop.permute.xlu0 %1279
        %1281 = vrot.lane.b32.xlu0 %v1235, 113
        %v1282 = vpop.permute.xlu0 %1281
        %1283 = vrot.lane.b32.xlu0 %v1236, 113
        %v1284 = vpop.permute.xlu0 %1283
        %v1293 = vsel %vm232, %v1246, %v1270
        %v1294 = vsel %vm232, %v1248, %v1272
        %v1295 = vsel %vm232, %v1250, %v1274
        %v1296 = vsel %vm232, %v1252, %v1276
        %v1297 = vsel %vm232, %v1254, %v1278
        %v1298 = vsel %vm232, %v1256, %v1280
        %v1299 = vsel %vm232, %v1258, %v1282
        %v1300 = vsel %vm232, %v1260, %v1284
        %v1301 = vsel %vm233, %v1270, %v1246
        %v1302 = vsel %vm233, %v1272, %v1248
        %v1303 = vsel %vm233, %v1274, %v1250
        %v1304 = vsel %vm233, %v1276, %v1252
        %v1305 = vsel %vm233, %v1278, %v1254
        %v1306 = vsel %vm233, %v1280, %v1256
        %v1307 = vsel %vm233, %v1282, %v1258
        %v1308 = vsel %vm233, %v1284, %v1260
        %v1309 = vadd.f32 %v1293, %v1181
        %v1310 = vadd.f32 %v1294, %v1182
        %v1311 = vadd.f32 %v1295, %v1183
        %v1312 = vadd.f32 %v1296, %v1184
        %v1313 = vadd.f32 %v1297, %v1185
        %v1314 = vadd.f32 %v1298, %v1186
        %v1315 = vadd.f32 %v1299, %v1187
        %v1316 = vadd.f32 %v1300, %v1188
        %v1317 = vadd.f32 %v1309, %v1301
        %v1318 = vadd.f32 %v1310, %v1302
        %v1319 = vadd.f32 %v1311, %v1303
        %v1320 = vadd.f32 %v1312, %v1304
        %v1321 = vadd.f32 %v1313, %v1305
        %v1322 = vadd.f32 %v1314, %v1306
        %v1323 = vadd.f32 %v1315, %v1307
        %v1324 = vadd.f32 %v1316, %v1308
        %v1325 = vmul.f32 %v1317, 0.11111111
        %v1326 = vmul.f32 %v1318, 0.11111111
        %v1327 = vmul.f32 %v1319, 0.11111111
        %v1328 = vmul.f32 %v1320, 0.11111111
        %v1329 = vmul.f32 %v1321, 0.11111111
        %v1330 = vmul.f32 %v1322, 0.11111111
        %v1331 = vmul.f32 %v1323, 0.11111111
        %v1332 = vmul.f32 %v1324, 0.11111111
        %v1333 = vmul.f32 %v437, %v645
        %v1334 = vmul.f32 %v438, %v646
        %v1335 = vmul.f32 %v439, %v647
        %v1336 = vmul.f32 %v440, %v648
        %v1337 = vmul.f32 %v441, %v649
        %v1338 = vmul.f32 %v442, %v650
        %v1339 = vmul.f32 %v443, %v651
        %v1340 = vmul.f32 %v444, %v652
        %v1341 = vsub.f32 %v1325, %v1333
        %v1342 = vsub.f32 %v1326, %v1334
        %v1343 = vsub.f32 %v1327, %v1335
        %v1344 = vsub.f32 %v1328, %v1336
        %v1345 = vsub.f32 %v1329, %v1337
        %v1346 = vsub.f32 %v1330, %v1338
        %v1347 = vsub.f32 %v1331, %v1339
        %v1348 = vsub.f32 %v1332, %v1340
        %v1349 = vmul.f32 %v437, 2.0
        %v1350 = vmul.f32 %v438, 2.0
        %v1351 = vmul.f32 %v439, 2.0
        %v1352 = vmul.f32 %v440, 2.0
        %v1353 = vmul.f32 %v441, 2.0
        %v1354 = vmul.f32 %v442, 2.0
        %v1355 = vmul.f32 %v443, 2.0
        %v1356 = vmul.f32 %v444, 2.0
        %v1357 = vmul.f32 %v1349, %v645
        %v1358 = vmul.f32 %v1350, %v646
        %v1359 = vmul.f32 %v1351, %v647
        %v1360 = vmul.f32 %v1352, %v648
        %v1361 = vmul.f32 %v1353, %v649
        %v1362 = vmul.f32 %v1354, %v650
        %v1363 = vmul.f32 %v1355, %v651
        %v1364 = vmul.f32 %v1356, %v652
        %v1365 = vadd.f32 %v1357, 0.0001
        %v1366 = vadd.f32 %v1358, 0.0001
        %v1367 = vadd.f32 %v1359, 0.0001
        %v1368 = vadd.f32 %v1360, 0.0001
        %v1369 = vadd.f32 %v1361, 0.0001
        %v1370 = vadd.f32 %v1362, 0.0001
        %v1371 = vadd.f32 %v1363, 0.0001
        %v1372 = vadd.f32 %v1364, 0.0001
        %v1373 = vmul.f32 %v1341, 2.0
        %v1374 = vmul.f32 %v1342, 2.0
        %v1375 = vmul.f32 %v1343, 2.0
        %v1376 = vmul.f32 %v1344, 2.0
        %v1377 = vmul.f32 %v1345, 2.0
        %v1378 = vmul.f32 %v1346, 2.0
        %v1379 = vmul.f32 %v1347, 2.0
        %v1380 = vmul.f32 %v1348, 2.0
        %v1381 = vadd.f32 %v1373, 0.0009
        %v1382 = vadd.f32 %v1374, 0.0009
        %v1383 = vadd.f32 %v1375, 0.0009
        %v1384 = vadd.f32 %v1376, 0.0009
        %v1385 = vadd.f32 %v1377, 0.0009
        %v1386 = vadd.f32 %v1378, 0.0009
        %v1387 = vadd.f32 %v1379, 0.0009
        %v1388 = vadd.f32 %v1380, 0.0009
        %v1389 = vmul.f32 %v1365, %v1381
        %v1390 = vmul.f32 %v1366, %v1382
        %v1391 = vmul.f32 %v1367, %v1383
        %v1392 = vmul.f32 %v1368, %v1384
        %v1393 = vmul.f32 %v1369, %v1385
        %v1394 = vmul.f32 %v1370, %v1386
        %v1395 = vmul.f32 %v1371, %v1387
        %v1396 = vmul.f32 %v1372, %v1388
        %v1397 = vadd.f32 %v869, %v1101
        %v1398 = vadd.f32 %v870, %v1102
        %v1399 = vadd.f32 %v871, %v1103
        %v1400 = vadd.f32 %v872, %v1104
        %v1401 = vadd.f32 %v873, %v1105
        %v1402 = vadd.f32 %v874, %v1106
        %v1403 = vadd.f32 %v875, %v1107
        %v1404 = vadd.f32 %v876, %v1108
        %v1405 = vadd.f32 %v1397, 0.0001
        %v1406 = vadd.f32 %v1398, 0.0001
        %v1407 = vadd.f32 %v1399, 0.0001
        %v1408 = vadd.f32 %v1400, 0.0001
        %v1409 = vadd.f32 %v1401, 0.0001
        %v1410 = vadd.f32 %v1402, 0.0001
        %v1411 = vadd.f32 %v1403, 0.0001
        %v1412 = vadd.f32 %v1404, 0.0001
        %v1413 = vadd.f32 %v877, %v1109
        %v1414 = vadd.f32 %v878, %v1110
        %v1415 = vadd.f32 %v879, %v1111
        %v1416 = vadd.f32 %v880, %v1112
        %v1417 = vadd.f32 %v881, %v1113
        %v1418 = vadd.f32 %v882, %v1114
        %v1419 = vadd.f32 %v883, %v1115
        %v1420 = vadd.f32 %v884, %v1116
        %v1421 = vadd.f32 %v1413, 0.0009
        %v1422 = vadd.f32 %v1414, 0.0009
        %v1423 = vadd.f32 %v1415, 0.0009
        %v1424 = vadd.f32 %v1416, 0.0009
        %v1425 = vadd.f32 %v1417, 0.0009
        %v1426 = vadd.f32 %v1418, 0.0009
        %v1427 = vadd.f32 %v1419, 0.0009
        %v1428 = vadd.f32 %v1420, 0.0009
        %v1429 = vmul.f32 %v1405, %v1421
        %v1430 = vmul.f32 %v1406, %v1422
        %v1431 = vmul.f32 %v1407, %v1423
        %v1432 = vmul.f32 %v1408, %v1424
        %v1433 = vmul.f32 %v1409, %v1425
        %v1434 = vmul.f32 %v1410, %v1426
        %v1435 = vmul.f32 %v1411, %v1427
        %v1436 = vmul.f32 %v1412, %v1428
        %v1437 = vrcp.pop %v1429
        %v1438 = vrcp.pop %v1430
        %v1439 = vrcp.pop %v1431
        %v1440 = vrcp.pop %v1432
        %v1441 = vrcp.pop %v1433
        %v1442 = vrcp.pop %v1434
        %v1443 = vrcp.pop %v1435
        %v1444 = vrcp.pop %v1436
        %v1445 = vmul.f32 %v1389, %v1437
        %v1446 = vmul.f32 %v1390, %v1438
        %v1447 = vmul.f32 %v1391, %v1439
        %v1448 = vmul.f32 %v1392, %v1440
        %v1449 = vmul.f32 %v1393, %v1441
        %v1450 = vmul.f32 %v1394, %v1442
        %v1451 = vmul.f32 %v1395, %v1443
        %v1452 = vmul.f32 %v1396, %v1444
        %v1453 = vsub.f32 1.0, %v1445
        %v1454 = vsub.f32 1.0, %v1446
        %v1455 = vsub.f32 1.0, %v1447
        %v1456 = vsub.f32 1.0, %v1448
        %v1457 = vsub.f32 1.0, %v1449
        %v1458 = vsub.f32 1.0, %v1450
        %v1459 = vsub.f32 1.0, %v1451
        %v1460 = vsub.f32 1.0, %v1452
        %v1461 = vmul.f32 %v1453, 0.5
        %v1462 = vmul.f32 %v1454, 0.5
        %v1463 = vmul.f32 %v1455, 0.5
        %v1464 = vmul.f32 %v1456, 0.5
        %v1465 = vmul.f32 %v1457, 0.5
        %v1466 = vmul.f32 %v1458, 0.5
        %v1467 = vmul.f32 %v1459, 0.5
        %v1468 = vmul.f32 %v1460, 0.5
        %v1469 = vmax.f32 %v1461, 0.0
        %v1470 = vmax.f32 %v1462, 0.0
        %v1471 = vmax.f32 %v1463, 0.0
        %v1472 = vmax.f32 %v1464, 0.0
        %v1473 = vmax.f32 %v1465, 0.0
        %v1474 = vmax.f32 %v1466, 0.0
        %v1475 = vmax.f32 %v1467, 0.0
        %v1476 = vmax.f32 %v1468, 0.0
        %v1477 = vmin.f32 %v1469, 1.0
        %v1478 = vmin.f32 %v1470, 1.0
        %v1479 = vmin.f32 %v1471, 1.0
        %v1480 = vmin.f32 %v1472, 1.0
        %v1481 = vmin.f32 %v1473, 1.0
        %v1482 = vmin.f32 %v1474, 1.0
        %v1483 = vmin.f32 %v1475, 1.0
        %v1484 = vmin.f32 %v1476, 1.0
        %vm1485 = vcmask 130048
        %1486 = vst.msk [vmem:[%s203] sm:$0xff] %vm1485, %v1477
        %1487 = vst.msk [vmem:[%s203 + $0x8] sm:$0xff] %vm1485, %v1478
        %1488 = vst.msk [vmem:[%s203 + $0x10] sm:$0xff] %vm1485, %v1479
        %1489 = vst.msk [vmem:[%s203 + $0x18] sm:$0xff] %vm1485, %v1480
        %1490 = vst.msk [vmem:[%s203 + $0x20] sm:$0xff] %vm1485, %v1481
        %1491 = vst.msk [vmem:[%s203 + $0x28] sm:$0xff] %vm1485, %v1482
        %1492 = vst.msk [vmem:[%s203 + $0x30] sm:$0xff] %vm1485, %v1483
        %1493 = vst.msk [vmem:[%s203 + $0x38] sm:$0xff] %vm1485, %v1484
        %s1494 = sand.u32 %s82, 1
        %s1495 = scalar_lea.sflag [#allocation4], %s1494
        %s1496 = sand.u32 %s82, 1
        %s1497 = smul.addr %s1496, 64
        %s1498 = scalar_lea.vmem [#allocation7], %s1497
        // Predicated region
        $region37: #{tpu_custom_call.1} parent=27 // pred_check
          %p1499 = pneg %p92
        $region38: #{tpu_custom_call.1} parent=27 // pred_check_branch
          %1501 = sbr.rel (%p1499) target = $region40
        $region39: #{tpu_custom_call.1} parent=27 // pred_region
          %s1502 = smul.u32 4, %s22
          %s1504 = ssub.s32 1024, 1024
          %1505 = vsyncadd %s1495, %s1504
          %s1506 = smul.addr %s1502, 2
          %s1507 = smul.addr %s1506, 128
          %s1508 = scalar_lea.hbm %s2, %s1507
          %s1509 = sshll.u32 %s1498, 4
          %s1510 = int_to_ptr.vmem [resolvable:$true] %s1509
          %1515 = dma.vmem_to_hbm [thread:$0]  %s1510, 1024, %s1508, %s1495, 128, 128, 8
        $region40: #{tpu_custom_call.1} parent=27 // pred_fallthru
          _
      $region28: #{tpu_custom_call.1} parent=5 // pred_fallthru
        _
      %p1516 = scmp.le.s32.totalorder 2, %s17
      // Predicated region
      $region41: #{tpu_custom_call.1} parent=5 // pred_check
        %p1517 = pneg %p1516
      $region42: #{tpu_custom_call.1} parent=5 // pred_check_branch
        %1519 = sbr.rel (%p1517) target = $region44
      $region43: #{tpu_custom_call.1} parent=5 // pred_region
        %s1520 = ssub.s32 %s17, 2
        // Predicated region
        $region45: #{tpu_custom_call.1} parent=43 // pred_check
          %p1521 = pneg %p98
        $region46: #{tpu_custom_call.1} parent=43 // pred_check_branch
          %1523 = sbr.rel (%p1521) target = $region48
        $region47: #{tpu_custom_call.1} parent=43 // pred_region
          %s1524 = sand.u32 %s83, 1
          %s1525 = scalar_lea.sflag [#allocation4], %s1524
          %s1526 = sand.u32 %s83, 1
          %s1527 = smul.addr %s1526, 64
          %s1528 = scalar_lea.vmem [#allocation7], %s1527
          %1529 = dma.done %s1525, 1024
        $region48: #{tpu_custom_call.1} parent=43 // pred_fallthru
          _
      $region44: #{tpu_custom_call.1} parent=5 // pred_fallthru
        _
    $region6: #{tpu_custom_call.1} parent=1 // loop_footer
      %s21 = sadd.s32 1, %s17
    $region7: #{tpu_custom_call.1} parent=1 // loop_footer_branch
      %16 = sbr.rel target = $region3
    $region8: #{tpu_custom_call.1} parent=1 // loop_exit
      _
    %1530 = vsyncpa [#allocation3], 1
    %s1531 = scalar_lea.sflag [#allocation3], 1
    %1532 = vsyncpa %s1531, 1
    %1533 = vsyncpa [#allocation6], 1
    %s1534 = scalar_lea.sflag [#allocation6], 1
    %1535 = vsyncpa %s1534, 1
    %1536 = vsyncpa [#allocation4], 1
    %s1537 = scalar_lea.sflag [#allocation4], 1
    %1538 = vsyncpa %s1537, 1

</llo_original>
